<compile_context>
chip_gen: v7x
topology: tpu7x:2x2x1
jax: 0.10.0
libtpu: 0.0.40
codegen_flags: <defaults>
</compile_context>

<pallas_src>
import jax
import jax.numpy as jnp
from jax.experimental import pallas as pl
from jax.experimental.pallas import tpu as pltpu

N_THETA = 37
N_PHI = 19
N_DIST = 37
N_OMEGA = 37
N_ASYM = N_THETA + N_PHI     # 56
N_SYMM = N_DIST + N_OMEGA    # 74
N_OUT = N_ASYM + N_SYMM      # 130
LN_EPS = 1e-5


def _distance_kernel(xr_ref, xc_ref, gamma_ref, beta_ref,
                     wt_ref, bt_ref, wp_ref, bp_ref,
                     wd_ref, bd_ref, wo_ref, bo_ref,
                     theta_ref, phi_ref, dist_ref, omega_ref):
    """One (batch, row-tile) step: LayerNorm -> symmetrize -> 4 channels-first projections."""
    TL, L, C = xr_ref.shape[1], xr_ref.shape[2], xr_ref.shape[3]
    m = TL * L
    mm_dtype = wt_ref.dtype            # matmul operand dtype chosen by the wrapper (f32 / bf16)

    gamma = gamma_ref[...].reshape(1, 1, C)
    beta = beta_ref[...].reshape(1, 1, C)

    def layer_norm(x):
        x = x.astype(jnp.float32)
        mean = jnp.mean(x, axis=-1, keepdims=True)
        # One-pass variance: E[x^2] - E[x]^2 (independent reductions, clamped for safety).
        var = jnp.maximum(jnp.mean(x * x, axis=-1, keepdims=True) - mean * mean, 0.0)
        return (x - mean) * jax.lax.rsqrt(var + LN_EPS) * gamma + beta

    xn_row = layer_norm(xr_ref[0])                       # (TL, L, C)  rows [i*TL, (i+1)*TL)
    xn_col = layer_norm(xc_ref[0])                       # (L, TL, C)  cols [i*TL, (i+1)*TL)

    # 0.5 * (xn[r, c] + xn[c, r]) using the column slab -- no full (L, L, C) transpose.
    xs = 0.5 * (xn_row + jnp.swapaxes(xn_col, 0, 1))     # (TL, L, C)

    # Channels-first operands: exactly TWO (m, C) -> (C, m) transposes per grid step; every
    # projection result is then already in the lane-dense channels-first store layout.
    xnT = xn_row.reshape(m, C).T.astype(mm_dtype)        # (C, m)
    xsT = xs.reshape(m, C).T.astype(mm_dtype)            # (C, m)

    def head(w_ref, b_ref, rhs):
        out = jnp.dot(w_ref[...], rhs, preferred_element_type=jnp.float32)   # (N_k, m) f32 acc
        return out + b_ref[...]                                              # (N_k, 1) bias

    theta_ref[0] = head(wt_ref, bt_ref, xnT).astype(theta_ref.dtype)   # (37, m)
    phi_ref[0] = head(wp_ref, bp_ref, xnT).astype(phi_ref.dtype)       # (19, m)
    dist_ref[0] = head(wd_ref, bd_ref, xsT).astype(dist_ref.dtype)     # (37, m)
    omega_ref[0] = head(wo_ref, bo_ref, xsT).astype(omega_ref.dtype)   # (37, m)


def _vmem_budget():
    """(vmem_limit_bytes, per-step tile budget) derived from the physical VMEM of this gen."""
    phys = None
    try:
        phys = int(pltpu.get_tpu_info().vmem_capacity_bytes)
    except Exception:
        phys = None
    if not phys or phys <= 0:
        phys = 64 * 1024 * 1024          # unknown: assume the smallest (v7x-class) VMEM
    vmem_limit = int(phys * 3 // 4)      # leave ~25% headroom for compiler-internal scratch
    tile_budget = vmem_limit // 3        # per-grid-step working-set target
    return vmem_limit, tile_budget


def _per_step_bytes(t, L, C, col_buffers):
    """Conservative per-grid-step VMEM estimate (f32), incl. intermediates and parameters."""
    m = t * L
    inputs = (2 + col_buffers) * m * C * 4            # row slab (2 bufs) + column slab
    outputs = 2 * m * N_OUT * 4                       # 4 output blocks, double-buffered
    params = 2 * (N_OUT * C + N_OUT + 2 * C) * 4      # weights + biases + gamma/beta
    temps = (5 * C + N_OUT) * m * 4                   # xn_row, xn_col, xs, xnT, xsT, results
    return inputs + outputs + params + temps


def _pick_tile(B, L, C, budget_bytes, col_buffers=2):
    """Largest row-tile TL (divides L, mult of 8, TL*L mult of 128) fitting the VMEM budget.

    Prefers a TL whose parallel grid (B * L/TL) is even so both v7x TensorCores stay busy,
    as long as that costs at most a 2x reduction in tile size.
    """
    cands = sorted({t for t in range(8, L, 8) if L % t == 0 and (t * L) % 128 == 0} | {L},
                   reverse=True)
    fitting = [t for t in cands if _per_step_bytes(t, L, C, col_buffers) <= budget_bytes]
    if not fitting:
        return cands[-1]
    best = fitting[0]
    for t in fitting:
        if (B * (L // t)) % 2 == 0 and 2 * t >= best:
            return t
    return best


def distance_network(x, gamma, beta, w_asym, b_asym, w_sym, b_sym, *,
                     tl=None, matmul_dtype=jnp.float32, col_slab_buffers=2):
    """x: (B, L, L, n_feat) float32.  Returns (dist, omega, theta, phi) in (B, C, L, L) layout.

    matmul_dtype=jnp.bfloat16 runs the two projections on the bf16 MXU path (f32 accumulation).
    col_slab_buffers=3 enables deeper pipelining on the strided column-slab DMA.
    """
    B, L, L2, C = x.shape
    assert L == L2

    vmem_limit, tile_budget = _vmem_budget()
    if tl is None:
        tl = _pick_tile(B, L, C, tile_budget, col_slab_buffers)
    assert L % tl == 0
    assert (tl == L) or (tl % 8 == 0 and (tl * L) % 128 == 0)
    m = tl * L
    n_tiles = L // tl

    # Per-head weight splits, pre-transposed to (N_k, C): in-kernel matmuls are
    # (N_k, C) @ (C, m) so results land channels-first with zero output transposes / slices.
    w_theta = jnp.asarray(w_asym[:, :N_THETA].T, dtype=matmul_dtype)    # (37, C)
    w_phi = jnp.asarray(w_asym[:, N_THETA:].T, dtype=matmul_dtype)      # (19, C)
    w_dist = jnp.asarray(w_sym[:, :N_DIST].T, dtype=matmul_dtype)       # (37, C)
    w_omega = jnp.asarray(w_sym[:, N_DIST:].T, dtype=matmul_dtype)      # (37, C)
    b_theta = b_asym[0, :N_THETA].reshape(N_THETA, 1).astype(jnp.float32)
    b_phi = b_asym[0, N_THETA:].reshape(N_PHI, 1).astype(jnp.float32)
    b_dist = b_sym[0, :N_DIST].reshape(N_DIST, 1).astype(jnp.float32)
    b_omega = b_sym[0, N_DIST:].reshape(N_OMEGA, 1).astype(jnp.float32)

    const = lambda b, i: (0, 0)

    # Matmul flops dominate; x is read twice (row + column slabs) -- see TODO(synk) above.
    flops = 2 * B * L * L * C * N_OUT + 12 * B * L * L * C
    bytes_accessed = 4 * (2 * B * L * L * C + B * L * L * N_OUT
                          + 2 * C + N_OUT * C + N_OUT)
    cost = pl.CostEstimate(flops=flops, transcendentals=2 * B * L * L,
                           bytes_accessed=bytes_accessed)

    col_kwargs = {}
    if col_slab_buffers != 2:
        col_kwargs["pipeline_mode"] = pl.Buffered(col_slab_buffers)

    theta, phi, dist, omega = pl.pallas_call(
        _distance_kernel,
        out_shape=(
            jax.ShapeDtypeStruct((B, N_THETA, L * L), jnp.float32),
            jax.ShapeDtypeStruct((B, N_PHI, L * L), jnp.float32),
            jax.ShapeDtypeStruct((B, N_DIST, L * L), jnp.float32),
            jax.ShapeDtypeStruct((B, N_OMEGA, L * L), jnp.float32),
        ),
        grid_spec=pltpu.PrefetchScalarGridSpec(
            num_scalar_prefetch=0,
            grid=(B, n_tiles),
            in_specs=[
                pl.BlockSpec((1, tl, L, C), lambda b, i: (b, i, 0, 0)),              # row slab
                pl.BlockSpec((1, L, tl, C), lambda b, i: (b, 0, i, 0), **col_kwargs),  # col slab
                pl.BlockSpec((1, C), const),          # gamma
                pl.BlockSpec((1, C), const),          # beta
                pl.BlockSpec((N_THETA, C), const),    # W_theta (37, C)
                pl.BlockSpec((N_THETA, 1), const),    # b_theta
                pl.BlockSpec((N_PHI, C), const),      # W_phi (19, C)
                pl.BlockSpec((N_PHI, 1), const),      # b_phi
                pl.BlockSpec((N_DIST, C), const),     # W_dist (37, C)
                pl.BlockSpec((N_DIST, 1), const),     # b_dist
                pl.BlockSpec((N_OMEGA, C), const),    # W_omega (37, C)
                pl.BlockSpec((N_OMEGA, 1), const),    # b_omega
            ],
            out_specs=[
                pl.BlockSpec((1, N_THETA, m), lambda b, i: (b, 0, i)),
                pl.BlockSpec((1, N_PHI, m), lambda b, i: (b, 0, i)),
                pl.BlockSpec((1, N_DIST, m), lambda b, i: (b, 0, i)),
                pl.BlockSpec((1, N_OMEGA, m), lambda b, i: (b, 0, i)),
            ],
        ),
        compiler_params=pltpu.CompilerParams(
            dimension_semantics=("parallel", "parallel"),
            vmem_limit_bytes=vmem_limit,
        ),
        cost_estimate=cost,
    )(x, x, gamma, beta,
      w_theta, b_theta, w_phi, b_phi, w_dist, b_dist, w_omega, b_omega)

    # Free, layout-preserving reshapes (B, C_out, L*L) -> (B, C_out, L, L); no transposes left.
    return (dist.reshape(B, N_DIST, L, L),
            omega.reshape(B, N_OMEGA, L, L),
            theta.reshape(B, N_THETA, L, L),
            phi.reshape(B, N_PHI, L, L))


def _reference(x, gamma, beta, w_asym, b_asym, w_sym, b_sym):
    """Pure-JAX reference mirroring the PyTorch forward."""
    mean = jnp.mean(x, axis=-1, keepdims=True)
    var = jnp.mean((x - mean) ** 2, axis=-1, keepdims=True)
    xn = (x - mean) / jnp.sqrt(var + LN_EPS) * gamma[0] + beta[0]
    asym = xn @ w_asym + b_asym[0]
    theta = jnp.transpose(asym[..., :N_THETA], (0, 3, 1, 2))
    phi = jnp.transpose(asym[..., N_THETA:], (0, 3, 1, 2))
    xs = 0.5 * (xn + jnp.transpose(xn, (0, 2, 1, 3)))
    sym = xs @ w_sym + b_sym[0]
    dist = jnp.transpose(sym[..., :N_DIST], (0, 3, 1, 2))
    omega = jnp.transpose(sym[..., N_DIST:], (0, 3, 1, 2))
    return dist, omega, theta, phi


if __name__ == "__main__":
    B, L, C = 2, 16, 32   # batch, pairwise length, n_feat (small test shapes)

    key = jax.random.PRNGKey(0)
    kx, kg, kb, kwa, kba, kws, kbs = jax.random.split(key, 7)

    x = jax.random.normal(kx, (B, L, L, C), dtype=jnp.float32)

    # Deterministic synthetic parameters (LayerNorm affine + two Linear layers, stored as W^T).
    gamma = 1.0 + 0.1 * jax.random.normal(kg, (1, C), dtype=jnp.float32)
    beta = 0.1 * jax.random.normal(kb, (1, C), dtype=jnp.float32)
    w_asym = jax.random.normal(kwa, (C, N_ASYM), dtype=jnp.float32) / jnp.sqrt(C)
    b_asym = 0.01 * jax.random.normal(kba, (1, N_ASYM), dtype=jnp.float32)
    w_sym = jax.random.normal(kws, (C, N_SYMM), dtype=jnp.float32) / jnp.sqrt(C)
    b_sym = 0.01 * jax.random.normal(kbs, (1, N_SYMM), dtype=jnp.float32)

    refs = _reference(x, gamma, beta, w_asym, b_asym, w_sym, b_sym)
    names = ("dist", "omega", "theta", "phi")

    # 1) Exact f32 path; tl=8 exercises multiple row tiles per batch element (grid = (2, 2)).
    outs = distance_network(x, gamma, beta, w_asym, b_asym, w_sym, b_sym, tl=8)
    outs = jax.block_until_ready(outs)
    for name, o, r in zip(names, outs, refs):
        assert o.shape == r.shape, (name, o.shape, r.shape)
        assert jnp.allclose(o, r, atol=1e-4, rtol=1e-4), f"f32 mismatch in {name}"

    # 2) bf16 MXU path + generation-aware auto tile selection (looser tolerance by design).
    outs_bf16 = distance_network(x, gamma, beta, w_asym, b_asym, w_sym, b_sym,
                                 matmul_dtype=jnp.bfloat16)
    outs_bf16 = jax.block_until_ready(outs_bf16)
    for name, o, r in zip(names, outs_bf16, refs):
        assert o.shape == r.shape, (name, o.shape, r.shape)
        assert jnp.allclose(o, r, atol=3e-2, rtol=3e-2), f"bf16 mismatch in {name}"

    print("KERNEL_OK")
</pallas_src>

<mosaic_0001>
module attributes {stable_mosaic.version = 11 : i64} {
  func.func @_distance_kernel(%arg0: i32, %arg1: i32, %arg2: memref<1x8x16x32xf32, #tpu.memory_space<vmem>>, %arg3: memref<1x16x8x32xf32, #tpu.memory_space<vmem>>, %arg4: memref<1x32xf32, #tpu.memory_space<vmem>>, %arg5: memref<1x32xf32, #tpu.memory_space<vmem>>, %arg6: memref<37x32xf32, #tpu.memory_space<vmem>>, %arg7: memref<37x1xf32, #tpu.memory_space<vmem>>, %arg8: memref<19x32xf32, #tpu.memory_space<vmem>>, %arg9: memref<19x1xf32, #tpu.memory_space<vmem>>, %arg10: memref<37x32xf32, #tpu.memory_space<vmem>>, %arg11: memref<37x1xf32, #tpu.memory_space<vmem>>, %arg12: memref<37x32xf32, #tpu.memory_space<vmem>>, %arg13: memref<37x1xf32, #tpu.memory_space<vmem>>, %arg14: memref<1x37x128xf32, #tpu.memory_space<vmem>>, %arg15: memref<1x19x128xf32, #tpu.memory_space<vmem>>, %arg16: memref<1x37x128xf32, #tpu.memory_space<vmem>>, %arg17: memref<1x37x128xf32, #tpu.memory_space<vmem>>) attributes {dimension_semantics = [#tpu.dimension_semantics<parallel>, #tpu.dimension_semantics<parallel>], iteration_bounds = array<i64: 2, 2>, scalar_prefetch = 0 : i64, scratch_operands = 0 : i64, tpu.core_type = #tpu.core_type<tc>, window_params = [{transform_indices = @transform_0, window_bounds = array<i64: 1, 8, 16, 32>}, {transform_indices = @transform_1, window_bounds = array<i64: 1, 16, 8, 32>}, {pipeline_mode = #tpu.pipeline_mode<synchronous>, transform_indices = @transform_2, window_bounds = array<i64: 1, 32>}, {pipeline_mode = #tpu.pipeline_mode<synchronous>, transform_indices = @transform_3, window_bounds = array<i64: 1, 32>}, {pipeline_mode = #tpu.pipeline_mode<synchronous>, transform_indices = @transform_4, window_bounds = array<i64: 37, 32>}, {pipeline_mode = #tpu.pipeline_mode<synchronous>, transform_indices = @transform_5, window_bounds = array<i64: 37, 1>}, {pipeline_mode = #tpu.pipeline_mode<synchronous>, transform_indices = @transform_6, window_bounds = array<i64: 19, 32>}, {pipeline_mode = #tpu.pipeline_mode<synchronous>, transform_indices = @transform_7, window_bounds = array<i64: 19, 1>}, {pipeline_mode = #tpu.pipeline_mode<synchronous>, transform_indices = @transform_8, window_bounds = array<i64: 37, 32>}, {pipeline_mode = #tpu.pipeline_mode<synchronous>, transform_indices = @transform_9, window_bounds = array<i64: 37, 1>}, {pipeline_mode = #tpu.pipeline_mode<synchronous>, transform_indices = @transform_10, window_bounds = array<i64: 37, 32>}, {pipeline_mode = #tpu.pipeline_mode<synchronous>, transform_indices = @transform_11, window_bounds = array<i64: 37, 1>}, {transform_indices = @transform_12, window_bounds = array<i64: 1, 37, 128>}, {transform_indices = @transform_13, window_bounds = array<i64: 1, 19, 128>}, {transform_indices = @transform_14, window_bounds = array<i64: 1, 37, 128>}, {transform_indices = @transform_15, window_bounds = array<i64: 1, 37, 128>}]} {
    %c0 = arith.constant 0 : index
    %c0_0 = arith.constant 0 : index
    %0 = vector.load %arg4[%c0, %c0_0] : memref<1x32xf32, #tpu.memory_space<vmem>>, vector<1x32xf32>
    %1 = vector.shape_cast %0 : vector<1x32xf32> to vector<1x1x32xf32>
    %c0_1 = arith.constant 0 : index
    %c0_2 = arith.constant 0 : index
    %2 = vector.load %arg5[%c0_1, %c0_2] : memref<1x32xf32, #tpu.memory_space<vmem>>, vector<1x32xf32>
    %3 = vector.shape_cast %2 : vector<1x32xf32> to vector<1x1x32xf32>
    %c0_3 = arith.constant 0 : index
    %c0_4 = arith.constant 0 : index
    %c0_5 = arith.constant 0 : index
    %c0_6 = arith.constant 0 : index
    %4 = vector.load %arg2[%c0_3, %c0_4, %c0_5, %c0_6] : memref<1x8x16x32xf32, #tpu.memory_space<vmem>>, vector<1x8x16x32xf32>
    %5 = vector.shape_cast %4 : vector<1x8x16x32xf32> to vector<8x16x32xf32>
    %cst = arith.constant dense<0.000000e+00> : vector<8x16xf32>
    %6 = vector.multi_reduction <add>, %5, %cst [2] : vector<8x16x32xf32> to vector<8x16xf32>
    %7 = vector.shape_cast %6 : vector<8x16xf32> to vector<8x16x1xf32>
    %cst_7 = arith.constant 3.200000e+01 : f32
    %8 = vector.broadcast %cst_7 : f32 to vector<8x16x1xf32>
    %9 = arith.divf %7, %8 : vector<8x16x1xf32>
    %10 = arith.mulf %5, %5 : vector<8x16x32xf32>
    %cst_8 = arith.constant dense<0.000000e+00> : vector<8x16xf32>
    %11 = vector.multi_reduction <add>, %10, %cst_8 [2] : vector<8x16x32xf32> to vector<8x16xf32>
    %12 = vector.shape_cast %11 : vector<8x16xf32> to vector<8x16x1xf32>
    %cst_9 = arith.constant 3.200000e+01 : f32
    %13 = vector.broadcast %cst_9 : f32 to vector<8x16x1xf32>
    %14 = arith.divf %12, %13 : vector<8x16x1xf32>
    %15 = arith.mulf %9, %9 : vector<8x16x1xf32>
    %16 = arith.subf %14, %15 : vector<8x16x1xf32>
    %cst_10 = arith.constant 0.000000e+00 : f32
    %17 = vector.broadcast %cst_10 : f32 to vector<8x16x1xf32>
    %18 = arith.maximumf %16, %17 : vector<8x16x1xf32>
    %19 = vector.broadcast %9 : vector<8x16x1xf32> to vector<8x16x32xf32>
    %20 = arith.subf %5, %19 : vector<8x16x32xf32>
    %cst_11 = arith.constant 9.99999974E-6 : f32
    %21 = vector.broadcast %cst_11 : f32 to vector<8x16x1xf32>
    %22 = arith.addf %18, %21 : vector<8x16x1xf32>
    %23 = math.rsqrt %22 : vector<8x16x1xf32>
    %24 = vector.broadcast %23 : vector<8x16x1xf32> to vector<8x16x32xf32>
    %25 = arith.mulf %20, %24 : vector<8x16x32xf32>
    %26 = vector.broadcast %1 : vector<1x1x32xf32> to vector<8x16x32xf32>
    %27 = arith.mulf %25, %26 : vector<8x16x32xf32>
    %28 = vector.broadcast %3 : vector<1x1x32xf32> to vector<8x16x32xf32>
    %29 = arith.addf %27, %28 : vector<8x16x32xf32>
    %c0_12 = arith.constant 0 : index
    %c0_13 = arith.constant 0 : index
    %c0_14 = arith.constant 0 : index
    %c0_15 = arith.constant 0 : index
    %30 = vector.load %arg3[%c0_12, %c0_13, %c0_14, %c0_15] : memref<1x16x8x32xf32, #tpu.memory_space<vmem>>, vector<1x16x8x32xf32>
    %31 = vector.shape_cast %30 : vector<1x16x8x32xf32> to vector<16x8x32xf32>
    %cst_16 = arith.constant dense<0.000000e+00> : vector<16x8xf32>
    %32 = vector.multi_reduction <add>, %31, %cst_16 [2] : vector<16x8x32xf32> to vector<16x8xf32>
    %33 = vector.shape_cast %32 : vector<16x8xf32> to vector<16x8x1xf32>
    %cst_17 = arith.constant 3.200000e+01 : f32
    %34 = vector.broadcast %cst_17 : f32 to vector<16x8x1xf32>
    %35 = arith.divf %33, %34 : vector<16x8x1xf32>
    %36 = arith.mulf %31, %31 : vector<16x8x32xf32>
    %cst_18 = arith.constant dense<0.000000e+00> : vector<16x8xf32>
    %37 = vector.multi_reduction <add>, %36, %cst_18 [2] : vector<16x8x32xf32> to vector<16x8xf32>
    %38 = vector.shape_cast %37 : vector<16x8xf32> to vector<16x8x1xf32>
    %cst_19 = arith.constant 3.200000e+01 : f32
    %39 = vector.broadcast %cst_19 : f32 to vector<16x8x1xf32>
    %40 = arith.divf %38, %39 : vector<16x8x1xf32>
    %41 = arith.mulf %35, %35 : vector<16x8x1xf32>
    %42 = arith.subf %40, %41 : vector<16x8x1xf32>
    %cst_20 = arith.constant 0.000000e+00 : f32
    %43 = vector.broadcast %cst_20 : f32 to vector<16x8x1xf32>
    %44 = arith.maximumf %42, %43 : vector<16x8x1xf32>
    %45 = vector.broadcast %35 : vector<16x8x1xf32> to vector<16x8x32xf32>
    %46 = arith.subf %31, %45 : vector<16x8x32xf32>
    %cst_21 = arith.constant 9.99999974E-6 : f32
    %47 = vector.broadcast %cst_21 : f32 to vector<16x8x1xf32>
    %48 = arith.addf %44, %47 : vector<16x8x1xf32>
    %49 = math.rsqrt %48 : vector<16x8x1xf32>
    %50 = vector.broadcast %49 : vector<16x8x1xf32> to vector<16x8x32xf32>
    %51 = arith.mulf %46, %50 : vector<16x8x32xf32>
    %52 = vector.broadcast %1 : vector<1x1x32xf32> to vector<16x8x32xf32>
    %53 = arith.mulf %51, %52 : vector<16x8x32xf32>
    %54 = vector.broadcast %3 : vector<1x1x32xf32> to vector<16x8x32xf32>
    %55 = arith.addf %53, %54 : vector<16x8x32xf32>
    %56 = tpu.transpose %55, [1, 0, 2] : vector<16x8x32xf32> -> vector<8x16x32xf32>
    %57 = arith.addf %29, %56 : vector<8x16x32xf32>
    %cst_22 = arith.constant 5.000000e-01 : f32
    %58 = vector.broadcast %cst_22 : f32 to vector<8x16x32xf32>
    %59 = arith.mulf %58, %57 : vector<8x16x32xf32>
    %60 = vector.shape_cast %29 : vector<8x16x32xf32> to vector<128x32xf32>
    %61 = tpu.transpose %60, [1, 0] : vector<128x32xf32> -> vector<32x128xf32>
    %62 = vector.shape_cast %59 : vector<8x16x32xf32> to vector<128x32xf32>
    %63 = tpu.transpose %62, [1, 0] : vector<128x32xf32> -> vector<32x128xf32>
    %c0_23 = arith.constant 0 : index
    %c0_24 = arith.constant 0 : index
    %64 = vector.load %arg6[%c0_23, %c0_24] : memref<37x32xf32, #tpu.memory_space<vmem>>, vector<37x32xf32>
    %cst_25 = arith.constant dense<0.000000e+00> : vector<37x128xf32>
    %65 = tpu.matmul %64, %61, %cst_25 {dimension_numbers = #tpu.dot_dimension_numbers<[1], [0], [0], [1], [0, 0, 1, 1], [], []>} : vector<37x32xf32>, vector<32x128xf32>, vector<37x128xf32> -> vector<37x128xf32>
    %c0_26 = arith.constant 0 : index
    %c0_27 = arith.constant 0 : index
    %66 = vector.load %arg7[%c0_26, %c0_27] : memref<37x1xf32, #tpu.memory_space<vmem>>, vector<37x1xf32>
    %67 = vector.broadcast %66 : vector<37x1xf32> to vector<37x128xf32>
    %68 = arith.addf %65, %67 : vector<37x128xf32>
    %c0_28 = arith.constant 0 : index
    %c0_29 = arith.constant 0 : index
    %c0_30 = arith.constant 0 : index
    %69 = vector.load %arg14[%c0_28, %c0_29, %c0_30] : memref<1x37x128xf32, #tpu.memory_space<vmem>>, vector<1x37x128xf32>
    %70 = vector.shape_cast %69 : vector<1x37x128xf32> to vector<37x128xf32>
    %71 = vector.shape_cast %68 : vector<37x128xf32> to vector<1x37x128xf32>
    tpu.vector_store %arg14[%c0_28, %c0_29, %c0_30], %71 {strides = array<i32>} : memref<1x37x128xf32, #tpu.memory_space<vmem>>, vector<1x37x128xf32>,
    %c0_31 = arith.constant 0 : index
    %c0_32 = arith.constant 0 : index
    %72 = vector.load %arg8[%c0_31, %c0_32] : memref<19x32xf32, #tpu.memory_space<vmem>>, vector<19x32xf32>
    %cst_33 = arith.constant dense<0.000000e+00> : vector<19x128xf32>
    %73 = tpu.matmul %72, %61, %cst_33 {dimension_numbers = #tpu.dot_dimension_numbers<[1], [0], [0], [1], [0, 0, 1, 1], [], []>} : vector<19x32xf32>, vector<32x128xf32>, vector<19x128xf32> -> vector<19x128xf32>
    %c0_34 = arith.constant 0 : index
    %c0_35 = arith.constant 0 : index
    %74 = vector.load %arg9[%c0_34, %c0_35] : memref<19x1xf32, #tpu.memory_space<vmem>>, vector<19x1xf32>
    %75 = vector.broadcast %74 : vector<19x1xf32> to vector<19x128xf32>
    %76 = arith.addf %73, %75 : vector<19x128xf32>
    %c0_36 = arith.constant 0 : index
    %c0_37 = arith.constant 0 : index
    %c0_38 = arith.constant 0 : index
    %77 = vector.load %arg15[%c0_36, %c0_37, %c0_38] : memref<1x19x128xf32, #tpu.memory_space<vmem>>, vector<1x19x128xf32>
    %78 = vector.shape_cast %77 : vector<1x19x128xf32> to vector<19x128xf32>
    %79 = vector.shape_cast %76 : vector<19x128xf32> to vector<1x19x128xf32>
    tpu.vector_store %arg15[%c0_36, %c0_37, %c0_38], %79 {strides = array<i32>} : memref<1x19x128xf32, #tpu.memory_space<vmem>>, vector<1x19x128xf32>,
    %c0_39 = arith.constant 0 : index
    %c0_40 = arith.constant 0 : index
    %80 = vector.load %arg10[%c0_39, %c0_40] : memref<37x32xf32, #tpu.memory_space<vmem>>, vector<37x32xf32>
    %cst_41 = arith.constant dense<0.000000e+00> : vector<37x128xf32>
    %81 = tpu.matmul %80, %63, %cst_41 {dimension_numbers = #tpu.dot_dimension_numbers<[1], [0], [0], [1], [0, 0, 1, 1], [], []>} : vector<37x32xf32>, vector<32x128xf32>, vector<37x128xf32> -> vector<37x128xf32>
    %c0_42 = arith.constant 0 : index
    %c0_43 = arith.constant 0 : index
    %82 = vector.load %arg11[%c0_42, %c0_43] : memref<37x1xf32, #tpu.memory_space<vmem>>, vector<37x1xf32>
    %83 = vector.broadcast %82 : vector<37x1xf32> to vector<37x128xf32>
    %84 = arith.addf %81, %83 : vector<37x128xf32>
    %c0_44 = arith.constant 0 : index
    %c0_45 = arith.constant 0 : index
    %c0_46 = arith.constant 0 : index
    %85 = vector.load %arg16[%c0_44, %c0_45, %c0_46] : memref<1x37x128xf32, #tpu.memory_space<vmem>>, vector<1x37x128xf32>
    %86 = vector.shape_cast %85 : vector<1x37x128xf32> to vector<37x128xf32>
    %87 = vector.shape_cast %84 : vector<37x128xf32> to vector<1x37x128xf32>
    tpu.vector_store %arg16[%c0_44, %c0_45, %c0_46], %87 {strides = array<i32>} : memref<1x37x128xf32, #tpu.memory_space<vmem>>, vector<1x37x128xf32>,
    %c0_47 = arith.constant 0 : index
    %c0_48 = arith.constant 0 : index
    %88 = vector.load %arg12[%c0_47, %c0_48] : memref<37x32xf32, #tpu.memory_space<vmem>>, vector<37x32xf32>
    %cst_49 = arith.constant dense<0.000000e+00> : vector<37x128xf32>
    %89 = tpu.matmul %88, %63, %cst_49 {dimension_numbers = #tpu.dot_dimension_numbers<[1], [0], [0], [1], [0, 0, 1, 1], [], []>} : vector<37x32xf32>, vector<32x128xf32>, vector<37x128xf32> -> vector<37x128xf32>
    %c0_50 = arith.constant 0 : index
    %c0_51 = arith.constant 0 : index
    %90 = vector.load %arg13[%c0_50, %c0_51] : memref<37x1xf32, #tpu.memory_space<vmem>>, vector<37x1xf32>
    %91 = vector.broadcast %90 : vector<37x1xf32> to vector<37x128xf32>
    %92 = arith.addf %89, %91 : vector<37x128xf32>
    %c0_52 = arith.constant 0 : index
    %c0_53 = arith.constant 0 : index
    %c0_54 = arith.constant 0 : index
    %93 = vector.load %arg17[%c0_52, %c0_53, %c0_54] : memref<1x37x128xf32, #tpu.memory_space<vmem>>, vector<1x37x128xf32>
    %94 = vector.shape_cast %93 : vector<1x37x128xf32> to vector<37x128xf32>
    %95 = vector.shape_cast %92 : vector<37x128xf32> to vector<1x37x128xf32>
    tpu.vector_store %arg17[%c0_52, %c0_53, %c0_54], %95 {strides = array<i32>} : memref<1x37x128xf32, #tpu.memory_space<vmem>>, vector<1x37x128xf32>,
    return
  }
  func.func @transform_0(%arg0: i32, %arg1: i32) -> (i32, i32, i32, i32) {
    %c0_i32 = arith.constant 0 : i32
    %c0_i32_0 = arith.constant 0 : i32
    %c0_i32_1 = arith.constant 0 : i32
    return %arg0, %arg1, %c0_i32, %c0_i32_0 : i32, i32, i32, i32
  }
  func.func @transform_1(%arg0: i32, %arg1: i32) -> (i32, i32, i32, i32) {
    %c0_i32 = arith.constant 0 : i32
    %c0_i32_0 = arith.constant 0 : i32
    %c0_i32_1 = arith.constant 0 : i32
    return %arg0, %c0_i32, %arg1, %c0_i32_0 : i32, i32, i32, i32
  }
  func.func @transform_2(%arg0: i32, %arg1: i32) -> (i32, i32) {
    %c0_i32 = arith.constant 0 : i32
    %c0_i32_0 = arith.constant 0 : i32
    %c0_i32_1 = arith.constant 0 : i32
    return %c0_i32, %c0_i32_0 : i32, i32
  }
  func.func @transform_3(%arg0: i32, %arg1: i32) -> (i32, i32) {
    %c0_i32 = arith.constant 0 : i32
    %c0_i32_0 = arith.constant 0 : i32
    %c0_i32_1 = arith.constant 0 : i32
    return %c0_i32, %c0_i32_0 : i32, i32
  }
  func.func @transform_4(%arg0: i32, %arg1: i32) -> (i32, i32) {
    %c0_i32 = arith.constant 0 : i32
    %c0_i32_0 = arith.constant 0 : i32
    %c0_i32_1 = arith.constant 0 : i32
    return %c0_i32, %c0_i32_0 : i32, i32
  }
  func.func @transform_5(%arg0: i32, %arg1: i32) -> (i32, i32) {
    %c0_i32 = arith.constant 0 : i32
    %c0_i32_0 = arith.constant 0 : i32
    %c0_i32_1 = arith.constant 0 : i32
    return %c0_i32, %c0_i32_0 : i32, i32
  }
  func.func @transform_6(%arg0: i32, %arg1: i32) -> (i32, i32) {
    %c0_i32 = arith.constant 0 : i32
    %c0_i32_0 = arith.constant 0 : i32
    %c0_i32_1 = arith.constant 0 : i32
    return %c0_i32, %c0_i32_0 : i32, i32
  }
  func.func @transform_7(%arg0: i32, %arg1: i32) -> (i32, i32) {
    %c0_i32 = arith.constant 0 : i32
    %c0_i32_0 = arith.constant 0 : i32
    %c0_i32_1 = arith.constant 0 : i32
    return %c0_i32, %c0_i32_0 : i32, i32
  }
  func.func @transform_8(%arg0: i32, %arg1: i32) -> (i32, i32) {
    %c0_i32 = arith.constant 0 : i32
    %c0_i32_0 = arith.constant 0 : i32
    %c0_i32_1 = arith.constant 0 : i32
    return %c0_i32, %c0_i32_0 : i32, i32
  }
  func.func @transform_9(%arg0: i32, %arg1: i32) -> (i32, i32) {
    %c0_i32 = arith.constant 0 : i32
    %c0_i32_0 = arith.constant 0 : i32
    %c0_i32_1 = arith.constant 0 : i32
    return %c0_i32, %c0_i32_0 : i32, i32
  }
  func.func @transform_10(%arg0: i32, %arg1: i32) -> (i32, i32) {
    %c0_i32 = arith.constant 0 : i32
    %c0_i32_0 = arith.constant 0 : i32
    %c0_i32_1 = arith.constant 0 : i32
    return %c0_i32, %c0_i32_0 : i32, i32
  }
  func.func @transform_11(%arg0: i32, %arg1: i32) -> (i32, i32) {
    %c0_i32 = arith.constant 0 : i32
    %c0_i32_0 = arith.constant 0 : i32
    %c0_i32_1 = arith.constant 0 : i32
    return %c0_i32, %c0_i32_0 : i32, i32
  }
  func.func @transform_12(%arg0: i32, %arg1: i32) -> (i32, i32, i32) {
    %c0_i32 = arith.constant 0 : i32
    %c0_i32_0 = arith.constant 0 : i32
    return %arg0, %c0_i32, %arg1 : i32, i32, i32
  }
  func.func @transform_13(%arg0: i32, %arg1: i32) -> (i32, i32, i32) {
    %c0_i32 = arith.constant 0 : i32
    %c0_i32_0 = arith.constant 0 : i32
    return %arg0, %c0_i32, %arg1 : i32, i32, i32
  }
  func.func @transform_14(%arg0: i32, %arg1: i32) -> (i32, i32, i32) {
    %c0_i32 = arith.constant 0 : i32
    %c0_i32_0 = arith.constant 0 : i32
    return %arg0, %c0_i32, %arg1 : i32, i32, i32
  }
  func.func @transform_15(%arg0: i32, %arg1: i32) -> (i32, i32, i32) {
    %c0_i32 = arith.constant 0 : i32
    %c0_i32_0 = arith.constant 0 : i32
    return %arg0, %c0_i32, %arg1 : i32, i32, i32
  }
}

</mosaic_0001>

<llo_original>
// kernel: tpu_custom_call.1
$region0: #{tpu_custom_call.1}
  #allocation0 [shape = 'u32[]', space=smem, size = 0x4, offset = 0x4, fixed_abs, tag = 'smem constant byte address 0x4 - core index']
  #allocation1 [shape = 'u32[144,128]{1,0:T(1,128)}', space=vmem, size = 0x12000, scoped, tag = 'internal scratch']
  %s0 = inlined_call_operand.hbm [shape: f32[2,16,16,32], index: 0, kind: input, shape index: {}]
  %s1 = inlined_call_operand.hbm [shape: f32[2,16,16,32], index: 1, kind: input, shape index: {}]
  %s2 = inlined_call_operand.vmem [shape: f32[1,32], index: 2, kind: input, shape index: {}]
  %s3 = inlined_call_operand.vmem [shape: f32[1,32], index: 3, kind: input, shape index: {}]
  %s4 = inlined_call_operand.vmem [shape: f32[37,32], index: 4, kind: input, shape index: {}]
  %s5 = inlined_call_operand.vmem [shape: f32[37,1], index: 5, kind: input, shape index: {}]
  %s6 = inlined_call_operand.vmem [shape: f32[19,32], index: 6, kind: input, shape index: {}]
  %s7 = inlined_call_operand.vmem [shape: f32[19,1], index: 7, kind: input, shape index: {}]
  %s8 = inlined_call_operand.vmem [shape: f32[37,32], index: 8, kind: input, shape index: {}]
  %s9 = inlined_call_operand.vmem [shape: f32[37,1], index: 9, kind: input, shape index: {}]
  %s10 = inlined_call_operand.vmem [shape: f32[37,32], index: 10, kind: input, shape index: {}]
  %s11 = inlined_call_operand.vmem [shape: f32[37,1], index: 11, kind: input, shape index: {}]
  %s12 = inlined_call_operand.vmem [shape: f32[2,37,256], index: 12, kind: output, shape index: {0}]
  %s13 = inlined_call_operand.vmem [shape: f32[2,19,256], index: 13, kind: output, shape index: {1}]
  %s14 = inlined_call_operand.vmem [shape: f32[2,37,256], index: 14, kind: output, shape index: {2}]
  %s15 = inlined_call_operand.vmem [shape: f32[2,37,256], index: 15, kind: output, shape index: {3}]
  %16 = xla_tuple %s12, %s13, %s14, %s15
  %s17 = sld [smem:[#allocation0]]
  $region249: #{tpu_custom_call.1} parent=0
    _
  %s19 = ssub.s32 1, %s17
  %s20 = scalar_select 0, %s19, %s17
  $region1: #{tpu_custom_call.1} parent=0
    #allocation2 [shape = 'u8[131072]{0}', space=vmem, size = 0x20000, scoped, tag = 'input window, operand 0']
    #allocation3 [shape = 's32[2]{0}', space=sflag, size = 0x8, scoped, tag = 'scoped memory for tpu_custom_call.1']
    #allocation4 [shape = 'u8[131072]{0}', space=vmem, size = 0x20000, scoped, tag = 'input window, operand 1']
    #allocation5 [shape = 's32[2]{0}', space=sflag, size = 0x8, scoped, tag = 'scoped memory for tpu_custom_call.1']
    #allocation6 [shape = 'u8[40960]{0}', space=vmem, size = 0xa000, scoped, tag = 'output window, operand 0']
    #allocation7 [shape = 'u8[24576]{0}', space=vmem, size = 0x6000, scoped, tag = 'output window, operand 1']
    #allocation8 [shape = 'u8[40960]{0}', space=vmem, size = 0xa000, scoped, tag = 'output window, operand 2']
    #allocation9 [shape = 'u8[40960]{0}', space=vmem, size = 0xa000, scoped, tag = 'output window, operand 3']
    %21 = vsyncpa [#allocation3], 0
    %s22 = scalar_lea.sflag [#allocation3], 1
    %23 = vsyncpa %s22, 0
    %24 = vsyncpa [#allocation5], 0
    %s25 = scalar_lea.sflag [#allocation5], 1
    %26 = vsyncpa %s25, 0
    loop: start=0, step=1, limit=6
    $region2: #{tpu_custom_call.1} parent=1 // loop_pre_header
      _
    $region3: #{tpu_custom_call.1} parent=1 // loop_header
      %s28 = sphi 0, %s32
      %p29 = scmp.ge.s32.totalorder %s28, 6
      %s35 = sphi 0, %s47
      %s36 = sphi 0, %s43
      %s37 = sphi 0, %s35
      %s38 = sphi 0, %s36
      %s39 = sphi 0, %s37
      %s40 = sphi 0, %s38
      %s52 = sphi 0, %s54
      %s55 = sphi 0, %s52
      %s56 = sphi 0, %s55
      %s72 = sphi 0, %s56
      %s80 = sphi 0, %s82
      %s83 = sphi 0, %s80
      %s84 = sphi 0, %s83
      %s100 = sphi 0, %s84
      %s104 = sphi 0, %s104
      %s106 = sphi 0, %s104
      %s107 = sphi 0, %s106
      %s121 = sphi 0, %s107
      %s125 = sphi 0, %s125
      %s127 = sphi 0, %s125
      %s128 = sphi 0, %s127
      %s142 = sphi 0, %s128
      %s146 = sphi 0, %s146
      %s148 = sphi 0, %s146
      %s149 = sphi 0, %s148
      %s163 = sphi 0, %s149
      %s167 = sphi 0, %s167
      %s169 = sphi 0, %s167
      %s170 = sphi 0, %s169
      %s184 = sphi 0, %s170
      %s188 = sphi 0, %s188
      %s190 = sphi 0, %s188
      %s191 = sphi 0, %s190
      %s205 = sphi 0, %s191
      %s209 = sphi 0, %s209
      %s211 = sphi 0, %s209
      %s212 = sphi 0, %s211
      %s226 = sphi 0, %s212
      %s230 = sphi 0, %s230
      %s232 = sphi 0, %s230
      %s233 = sphi 0, %s232
      %s247 = sphi 0, %s233
      %s251 = sphi 0, %s251
      %s253 = sphi 0, %s251
      %s254 = sphi 0, %s253
      %s268 = sphi 0, %s254
      %s272 = sphi 0, %s272
      %s274 = sphi 0, %s272
      %s275 = sphi 0, %s274
      %s289 = sphi 0, %s275
      %s293 = sphi 0, %s293
      %s295 = sphi 0, %s293
      %s296 = sphi 0, %s295
      %s310 = sphi 0, %s296
      %s318 = sphi 0, %s320
      %s321 = sphi 0, %s318
      %s322 = sphi 0, %s321
      %s338 = sphi 0, %s322
      %s346 = sphi 0, %s348
      %s349 = sphi 0, %s346
      %s350 = sphi 0, %s349
      %s366 = sphi 0, %s350
      %s374 = sphi 0, %s376
      %s377 = sphi 0, %s374
      %s378 = sphi 0, %s377
      %s394 = sphi 0, %s378
      %s402 = sphi 0, %s404
      %s405 = sphi 0, %s402
      %s406 = sphi 0, %s405
      %s422 = sphi 0, %s406
    $region4: #{tpu_custom_call.1} parent=1 // loop_header_branch
      %31 = sbr.rel (%p29) target = $region8
    $region5: #{tpu_custom_call.1} parent=1 // loop_body
      %s33 = ssub.s32 %s28, 1
      %s34 = ssub.s32 %s28, 2
      %s41 = sadd.s32 1, %s36
      %p42 = scmp.ge.s32.totalorder %s41, 2
      %s43 = scalar_select %p42, 0, %s41
      %s44 = sadd.s32 1, %s35
      %s45 = scalar_select %p42, %s44, %s35
      %p46 = scmp.ge.s32.totalorder %s45, 2
      %s47 = scalar_select %p46, 0, %s45
      %s48 = ssub.s32 %s35, %s47
      %s49 = ssub.s32 %s36, %s43
      %s50 = sor.u32 %s48, %s49
      %p51 = scmp.eq.s32.totalorder %s50, 0
      %s53 = sadd.s32 %s52, 1
      %s54 = scalar_select %p51, %s52, %s53
      %p57 = pneg %p51
      %p58 = scmp.eq.s32.totalorder %s28, 3
      %p59 = por %p57, %p58
      %p60 = scmp.ne.s32.totalorder %s52, %s55
      %p61 = scmp.eq.s32.totalorder %s28, 0
      %p62 = por %p60, %p61
      %p63 = scmp.ne.s32.totalorder %s52, %s55
      %p64 = scmp.eq.s32.totalorder %s33, 3
      %p65 = por %p63, %p64
      %p66 = scmp.ne.s32.totalorder %s55, %s56
      %p67 = scmp.eq.s32.totalorder %s33, 0
      %p68 = por %p66, %p67
      %p69 = scmp.ne.s32.totalorder %s55, %s56
      %p70 = scmp.eq.s32.totalorder %s34, 3
      %p71 = por %p69, %p70
      %p73 = scmp.ne.s32.totalorder %s56, %s72
      %p74 = scmp.eq.s32.totalorder %s34, 0
      %p75 = por %p73, %p74
      %s76 = ssub.s32 %s35, %s47
      %s77 = ssub.s32 %s36, %s43
      %s78 = sor.u32 %s76, %s77
      %p79 = scmp.eq.s32.totalorder %s78, 0
      %s81 = sadd.s32 %s80, 1
      %s82 = scalar_select %p79, %s80, %s81
      %p85 = pneg %p79
      %p86 = scmp.eq.s32.totalorder %s28, 3
      %p87 = por %p85, %p86
      %p88 = scmp.ne.s32.totalorder %s80, %s83
      %p89 = scmp.eq.s32.totalorder %s28, 0
      %p90 = por %p88, %p89
      %p91 = scmp.ne.s32.totalorder %s80, %s83
      %p92 = scmp.eq.s32.totalorder %s33, 3
      %p93 = por %p91, %p92
      %p94 = scmp.ne.s32.totalorder %s83, %s84
      %p95 = scmp.eq.s32.totalorder %s33, 0
      %p96 = por %p94, %p95
      %p97 = scmp.ne.s32.totalorder %s83, %s84
      %p98 = scmp.eq.s32.totalorder %s34, 3
      %p99 = por %p97, %p98
      %p101 = scmp.ne.s32.totalorder %s84, %s100
      %p102 = scmp.eq.s32.totalorder %s34, 0
      %p103 = por %p101, %p102
      %s105 = sadd.s32 %s104, 1
      %p108 = scmp.eq.s32.totalorder %s28, 3
      %p109 = scmp.ne.s32.totalorder %s104, %s106
      %p110 = scmp.eq.s32.totalorder %s28, 0
      %p111 = por %p109, %p110
      %p112 = scmp.ne.s32.totalorder %s104, %s106
      %p113 = scmp.eq.s32.totalorder %s33, 3
      %p114 = por %p112, %p113
      %p115 = scmp.ne.s32.totalorder %s106, %s107
      %p116 = scmp.eq.s32.totalorder %s33, 0
      %p117 = por %p115, %p116
      %p118 = scmp.ne.s32.totalorder %s106, %s107
      %p119 = scmp.eq.s32.totalorder %s34, 3
      %p120 = por %p118, %p119
      %p122 = scmp.ne.s32.totalorder %s107, %s121
      %p123 = scmp.eq.s32.totalorder %s34, 0
      %p124 = por %p122, %p123
      %s126 = sadd.s32 %s125, 1
      %p129 = scmp.eq.s32.totalorder %s28, 3
      %p130 = scmp.ne.s32.totalorder %s125, %s127
      %p131 = scmp.eq.s32.totalorder %s28, 0
      %p132 = por %p130, %p131
      %p133 = scmp.ne.s32.totalorder %s125, %s127
      %p134 = scmp.eq.s32.totalorder %s33, 3
      %p135 = por %p133, %p134
      %p136 = scmp.ne.s32.totalorder %s127, %s128
      %p137 = scmp.eq.s32.totalorder %s33, 0
      %p138 = por %p136, %p137
      %p139 = scmp.ne.s32.totalorder %s127, %s128
      %p140 = scmp.eq.s32.totalorder %s34, 3
      %p141 = por %p139, %p140
      %p143 = scmp.ne.s32.totalorder %s128, %s142
      %p144 = scmp.eq.s32.totalorder %s34, 0
      %p145 = por %p143, %p144
      %s147 = sadd.s32 %s146, 1
      %p150 = scmp.eq.s32.totalorder %s28, 3
      %p151 = scmp.ne.s32.totalorder %s146, %s148
      %p152 = scmp.eq.s32.totalorder %s28, 0
      %p153 = por %p151, %p152
      %p154 = scmp.ne.s32.totalorder %s146, %s148
      %p155 = scmp.eq.s32.totalorder %s33, 3
      %p156 = por %p154, %p155
      %p157 = scmp.ne.s32.totalorder %s148, %s149
      %p158 = scmp.eq.s32.totalorder %s33, 0
      %p159 = por %p157, %p158
      %p160 = scmp.ne.s32.totalorder %s148, %s149
      %p161 = scmp.eq.s32.totalorder %s34, 3
      %p162 = por %p160, %p161
      %p164 = scmp.ne.s32.totalorder %s149, %s163
      %p165 = scmp.eq.s32.totalorder %s34, 0
      %p166 = por %p164, %p165
      %s168 = sadd.s32 %s167, 1
      %p171 = scmp.eq.s32.totalorder %s28, 3
      %p172 = scmp.ne.s32.totalorder %s167, %s169
      %p173 = scmp.eq.s32.totalorder %s28, 0
      %p174 = por %p172, %p173
      %p175 = scmp.ne.s32.totalorder %s167, %s169
      %p176 = scmp.eq.s32.totalorder %s33, 3
      %p177 = por %p175, %p176
      %p178 = scmp.ne.s32.totalorder %s169, %s170
      %p179 = scmp.eq.s32.totalorder %s33, 0
      %p180 = por %p178, %p179
      %p181 = scmp.ne.s32.totalorder %s169, %s170
      %p182 = scmp.eq.s32.totalorder %s34, 3
      %p183 = por %p181, %p182
      %p185 = scmp.ne.s32.totalorder %s170, %s184
      %p186 = scmp.eq.s32.totalorder %s34, 0
      %p187 = por %p185, %p186
      %s189 = sadd.s32 %s188, 1
      %p192 = scmp.eq.s32.totalorder %s28, 3
      %p193 = scmp.ne.s32.totalorder %s188, %s190
      %p194 = scmp.eq.s32.totalorder %s28, 0
      %p195 = por %p193, %p194
      %p196 = scmp.ne.s32.totalorder %s188, %s190
      %p197 = scmp.eq.s32.totalorder %s33, 3
      %p198 = por %p196, %p197
      %p199 = scmp.ne.s32.totalorder %s190, %s191
      %p200 = scmp.eq.s32.totalorder %s33, 0
      %p201 = por %p199, %p200
      %p202 = scmp.ne.s32.totalorder %s190, %s191
      %p203 = scmp.eq.s32.totalorder %s34, 3
      %p204 = por %p202, %p203
      %p206 = scmp.ne.s32.totalorder %s191, %s205
      %p207 = scmp.eq.s32.totalorder %s34, 0
      %p208 = por %p206, %p207
      %s210 = sadd.s32 %s209, 1
      %p213 = scmp.eq.s32.totalorder %s28, 3
      %p214 = scmp.ne.s32.totalorder %s209, %s211
      %p215 = scmp.eq.s32.totalorder %s28, 0
      %p216 = por %p214, %p215
      %p217 = scmp.ne.s32.totalorder %s209, %s211
      %p218 = scmp.eq.s32.totalorder %s33, 3
      %p219 = por %p217, %p218
      %p220 = scmp.ne.s32.totalorder %s211, %s212
      %p221 = scmp.eq.s32.totalorder %s33, 0
      %p222 = por %p220, %p221
      %p223 = scmp.ne.s32.totalorder %s211, %s212
      %p224 = scmp.eq.s32.totalorder %s34, 3
      %p225 = por %p223, %p224
      %p227 = scmp.ne.s32.totalorder %s212, %s226
      %p228 = scmp.eq.s32.totalorder %s34, 0
      %p229 = por %p227, %p228
      %s231 = sadd.s32 %s230, 1
      %p234 = scmp.eq.s32.totalorder %s28, 3
      %p235 = scmp.ne.s32.totalorder %s230, %s232
      %p236 = scmp.eq.s32.totalorder %s28, 0
      %p237 = por %p235, %p236
      %p238 = scmp.ne.s32.totalorder %s230, %s232
      %p239 = scmp.eq.s32.totalorder %s33, 3
      %p240 = por %p238, %p239
      %p241 = scmp.ne.s32.totalorder %s232, %s233
      %p242 = scmp.eq.s32.totalorder %s33, 0
      %p243 = por %p241, %p242
      %p244 = scmp.ne.s32.totalorder %s232, %s233
      %p245 = scmp.eq.s32.totalorder %s34, 3
      %p246 = por %p244, %p245
      %p248 = scmp.ne.s32.totalorder %s233, %s247
      %p249 = scmp.eq.s32.totalorder %s34, 0
      %p250 = por %p248, %p249
      %s252 = sadd.s32 %s251, 1
      %p255 = scmp.eq.s32.totalorder %s28, 3
      %p256 = scmp.ne.s32.totalorder %s251, %s253
      %p257 = scmp.eq.s32.totalorder %s28, 0
      %p258 = por %p256, %p257
      %p259 = scmp.ne.s32.totalorder %s251, %s253
      %p260 = scmp.eq.s32.totalorder %s33, 3
      %p261 = por %p259, %p260
      %p262 = scmp.ne.s32.totalorder %s253, %s254
      %p263 = scmp.eq.s32.totalorder %s33, 0
      %p264 = por %p262, %p263
      %p265 = scmp.ne.s32.totalorder %s253, %s254
      %p266 = scmp.eq.s32.totalorder %s34, 3
      %p267 = por %p265, %p266
      %p269 = scmp.ne.s32.totalorder %s254, %s268
      %p270 = scmp.eq.s32.totalorder %s34, 0
      %p271 = por %p269, %p270
      %s273 = sadd.s32 %s272, 1
      %p276 = scmp.eq.s32.totalorder %s28, 3
      %p277 = scmp.ne.s32.totalorder %s272, %s274
      %p278 = scmp.eq.s32.totalorder %s28, 0
      %p279 = por %p277, %p278
      %p280 = scmp.ne.s32.totalorder %s272, %s274
      %p281 = scmp.eq.s32.totalorder %s33, 3
      %p282 = por %p280, %p281
      %p283 = scmp.ne.s32.totalorder %s274, %s275
      %p284 = scmp.eq.s32.totalorder %s33, 0
      %p285 = por %p283, %p284
      %p286 = scmp.ne.s32.totalorder %s274, %s275
      %p287 = scmp.eq.s32.totalorder %s34, 3
      %p288 = por %p286, %p287
      %p290 = scmp.ne.s32.totalorder %s275, %s289
      %p291 = scmp.eq.s32.totalorder %s34, 0
      %p292 = por %p290, %p291
      %s294 = sadd.s32 %s293, 1
      %p297 = scmp.eq.s32.totalorder %s28, 3
      %p298 = scmp.ne.s32.totalorder %s293, %s295
      %p299 = scmp.eq.s32.totalorder %s28, 0
      %p300 = por %p298, %p299
      %p301 = scmp.ne.s32.totalorder %s293, %s295
      %p302 = scmp.eq.s32.totalorder %s33, 3
      %p303 = por %p301, %p302
      %p304 = scmp.ne.s32.totalorder %s295, %s296
      %p305 = scmp.eq.s32.totalorder %s33, 0
      %p306 = por %p304, %p305
      %p307 = scmp.ne.s32.totalorder %s295, %s296
      %p308 = scmp.eq.s32.totalorder %s34, 3
      %p309 = por %p307, %p308
      %p311 = scmp.ne.s32.totalorder %s296, %s310
      %p312 = scmp.eq.s32.totalorder %s34, 0
      %p313 = por %p311, %p312
      %s314 = ssub.s32 %s35, %s47
      %s315 = ssub.s32 %s36, %s43
      %s316 = sor.u32 %s314, %s315
      %p317 = scmp.eq.s32.totalorder %s316, 0
      %s319 = sadd.s32 %s318, 1
      %s320 = scalar_select %p317, %s318, %s319
      %p323 = pneg %p317
      %p324 = scmp.eq.s32.totalorder %s28, 3
      %p325 = por %p323, %p324
      %p326 = scmp.ne.s32.totalorder %s318, %s321
      %p327 = scmp.eq.s32.totalorder %s28, 0
      %p328 = por %p326, %p327
      %p329 = scmp.ne.s32.totalorder %s318, %s321
      %p330 = scmp.eq.s32.totalorder %s33, 3
      %p331 = por %p329, %p330
      %p332 = scmp.ne.s32.totalorder %s321, %s322
      %p333 = scmp.eq.s32.totalorder %s33, 0
      %p334 = por %p332, %p333
      %p335 = scmp.ne.s32.totalorder %s321, %s322
      %p336 = scmp.eq.s32.totalorder %s34, 3
      %p337 = por %p335, %p336
      %p339 = scmp.ne.s32.totalorder %s322, %s338
      %p340 = scmp.eq.s32.totalorder %s34, 0
      %p341 = por %p339, %p340
      %s342 = ssub.s32 %s35, %s47
      %s343 = ssub.s32 %s36, %s43
      %s344 = sor.u32 %s342, %s343
      %p345 = scmp.eq.s32.totalorder %s344, 0
      %s347 = sadd.s32 %s346, 1
      %s348 = scalar_select %p345, %s346, %s347
      %p351 = pneg %p345
      %p352 = scmp.eq.s32.totalorder %s28, 3
      %p353 = por %p351, %p352
      %p354 = scmp.ne.s32.totalorder %s346, %s349
      %p355 = scmp.eq.s32.totalorder %s28, 0
      %p356 = por %p354, %p355
      %p357 = scmp.ne.s32.totalorder %s346, %s349
      %p358 = scmp.eq.s32.totalorder %s33, 3
      %p359 = por %p357, %p358
      %p360 = scmp.ne.s32.totalorder %s349, %s350
      %p361 = scmp.eq.s32.totalorder %s33, 0
      %p362 = por %p360, %p361
      %p363 = scmp.ne.s32.totalorder %s349, %s350
      %p364 = scmp.eq.s32.totalorder %s34, 3
      %p365 = por %p363, %p364
      %p367 = scmp.ne.s32.totalorder %s350, %s366
      %p368 = scmp.eq.s32.totalorder %s34, 0
      %p369 = por %p367, %p368
      %s370 = ssub.s32 %s35, %s47
      %s371 = ssub.s32 %s36, %s43
      %s372 = sor.u32 %s370, %s371
      %p373 = scmp.eq.s32.totalorder %s372, 0
      %s375 = sadd.s32 %s374, 1
      %s376 = scalar_select %p373, %s374, %s375
      %p379 = pneg %p373
      %p380 = scmp.eq.s32.totalorder %s28, 3
      %p381 = por %p379, %p380
      %p382 = scmp.ne.s32.totalorder %s374, %s377
      %p383 = scmp.eq.s32.totalorder %s28, 0
      %p384 = por %p382, %p383
      %p385 = scmp.ne.s32.totalorder %s374, %s377
      %p386 = scmp.eq.s32.totalorder %s33, 3
      %p387 = por %p385, %p386
      %p388 = scmp.ne.s32.totalorder %s377, %s378
      %p389 = scmp.eq.s32.totalorder %s33, 0
      %p390 = por %p388, %p389
      %p391 = scmp.ne.s32.totalorder %s377, %s378
      %p392 = scmp.eq.s32.totalorder %s34, 3
      %p393 = por %p391, %p392
      %p395 = scmp.ne.s32.totalorder %s378, %s394
      %p396 = scmp.eq.s32.totalorder %s34, 0
      %p397 = por %p395, %p396
      %s398 = ssub.s32 %s35, %s47
      %s399 = ssub.s32 %s36, %s43
      %s400 = sor.u32 %s398, %s399
      %p401 = scmp.eq.s32.totalorder %s400, 0
      %s403 = sadd.s32 %s402, 1
      %s404 = scalar_select %p401, %s402, %s403
      %p407 = pneg %p401
      %p408 = scmp.eq.s32.totalorder %s28, 3
      %p409 = por %p407, %p408
      %p410 = scmp.ne.s32.totalorder %s402, %s405
      %p411 = scmp.eq.s32.totalorder %s28, 0
      %p412 = por %p410, %p411
      %p413 = scmp.ne.s32.totalorder %s402, %s405
      %p414 = scmp.eq.s32.totalorder %s33, 3
      %p415 = por %p413, %p414
      %p416 = scmp.ne.s32.totalorder %s405, %s406
      %p417 = scmp.eq.s32.totalorder %s33, 0
      %p418 = por %p416, %p417
      %p419 = scmp.ne.s32.totalorder %s405, %s406
      %p420 = scmp.eq.s32.totalorder %s34, 3
      %p421 = por %p419, %p420
      %p423 = scmp.ne.s32.totalorder %s406, %s422
      %p424 = scmp.eq.s32.totalorder %s34, 0
      %p425 = por %p423, %p424
      %p426 = scmp.le.s32.totalorder 1, %s28
      %p427 = scmp.lt.s32.totalorder %s28, 5
      %p428 = pnand %p426, %p427
      %p429 = pneg %p428
      // Predicated region
      $region9: #{tpu_custom_call.1} parent=5 // pred_check
        _
      $region10: #{tpu_custom_call.1} parent=5 // pred_check_branch
        %431 = sbr.rel (%p428) target = $region12
      $region11: #{tpu_custom_call.1} parent=5 // pred_region
        %s432 = ssub.s32 %s28, 1
        // Predicated region
        $region13: #{tpu_custom_call.1} parent=11 // pred_check
          %p433 = pneg %p117
        $region14: #{tpu_custom_call.1} parent=11 // pred_check_branch
          %435 = sbr.rel (%p433) target = $region16
        $region15: #{tpu_custom_call.1} parent=11 // pred_region
          _
        $region16: #{tpu_custom_call.1} parent=11 // pred_fallthru
          _
        // Predicated region
        $region17: #{tpu_custom_call.1} parent=11 // pred_check
          %p436 = pneg %p138
        $region18: #{tpu_custom_call.1} parent=11 // pred_check_branch
          %438 = sbr.rel (%p436) target = $region20
        $region19: #{tpu_custom_call.1} parent=11 // pred_region
          _
        $region20: #{tpu_custom_call.1} parent=11 // pred_fallthru
          _
        // Predicated region
        $region21: #{tpu_custom_call.1} parent=11 // pred_check
          %p439 = pneg %p159
        $region22: #{tpu_custom_call.1} parent=11 // pred_check_branch
          %441 = sbr.rel (%p439) target = $region24
        $region23: #{tpu_custom_call.1} parent=11 // pred_region
          _
        $region24: #{tpu_custom_call.1} parent=11 // pred_fallthru
          _
        // Predicated region
        $region25: #{tpu_custom_call.1} parent=11 // pred_check
          %p442 = pneg %p180
        $region26: #{tpu_custom_call.1} parent=11 // pred_check_branch
          %444 = sbr.rel (%p442) target = $region28
        $region27: #{tpu_custom_call.1} parent=11 // pred_region
          _
        $region28: #{tpu_custom_call.1} parent=11 // pred_fallthru
          _
        // Predicated region
        $region29: #{tpu_custom_call.1} parent=11 // pred_check
          %p445 = pneg %p201
        $region30: #{tpu_custom_call.1} parent=11 // pred_check_branch
          %447 = sbr.rel (%p445) target = $region32
        $region31: #{tpu_custom_call.1} parent=11 // pred_region
          _
        $region32: #{tpu_custom_call.1} parent=11 // pred_fallthru
          _
        // Predicated region
        $region33: #{tpu_custom_call.1} parent=11 // pred_check
          %p448 = pneg %p222
        $region34: #{tpu_custom_call.1} parent=11 // pred_check_branch
          %450 = sbr.rel (%p448) target = $region36
        $region35: #{tpu_custom_call.1} parent=11 // pred_region
          _
        $region36: #{tpu_custom_call.1} parent=11 // pred_fallthru
          _
        // Predicated region
        $region37: #{tpu_custom_call.1} parent=11 // pred_check
          %p451 = pneg %p243
        $region38: #{tpu_custom_call.1} parent=11 // pred_check_branch
          %453 = sbr.rel (%p451) target = $region40
        $region39: #{tpu_custom_call.1} parent=11 // pred_region
          _
        $region40: #{tpu_custom_call.1} parent=11 // pred_fallthru
          _
        // Predicated region
        $region41: #{tpu_custom_call.1} parent=11 // pred_check
          %p454 = pneg %p264
        $region42: #{tpu_custom_call.1} parent=11 // pred_check_branch
          %456 = sbr.rel (%p454) target = $region44
        $region43: #{tpu_custom_call.1} parent=11 // pred_region
          _
        $region44: #{tpu_custom_call.1} parent=11 // pred_fallthru
          _
        // Predicated region
        $region45: #{tpu_custom_call.1} parent=11 // pred_check
          %p457 = pneg %p285
        $region46: #{tpu_custom_call.1} parent=11 // pred_check_branch
          %459 = sbr.rel (%p457) target = $region48
        $region47: #{tpu_custom_call.1} parent=11 // pred_region
          _
        $region48: #{tpu_custom_call.1} parent=11 // pred_fallthru
          _
        // Predicated region
        $region49: #{tpu_custom_call.1} parent=11 // pred_check
          %p460 = pneg %p306
        $region50: #{tpu_custom_call.1} parent=11 // pred_check_branch
          %462 = sbr.rel (%p460) target = $region52
        $region51: #{tpu_custom_call.1} parent=11 // pred_region
          _
        $region52: #{tpu_custom_call.1} parent=11 // pred_fallthru
          _
      $region12: #{tpu_custom_call.1} parent=5 // pred_fallthru
        _
      %p463 = scmp.lt.s32.totalorder %s28, 4
      // Predicated region
      $region53: #{tpu_custom_call.1} parent=5 // pred_check
        %p464 = pneg %p463
      $region54: #{tpu_custom_call.1} parent=5 // pred_check_branch
        %466 = sbr.rel (%p464) target = $region56
      $region55: #{tpu_custom_call.1} parent=5 // pred_region
        // Predicated region
        $region57: #{tpu_custom_call.1} parent=55 // pred_check
          %p467 = pneg %p62
        $region58: #{tpu_custom_call.1} parent=55 // pred_check_branch
          %469 = sbr.rel (%p467) target = $region60
        $region59: #{tpu_custom_call.1} parent=55 // pred_region
          %s470 = sand.u32 %s52, 1
          %s471 = scalar_lea.sflag [#allocation3], %s470
          %s472 = sand.u32 %s52, 1
          %s473 = smul.addr %s472, 128
          %s474 = scalar_lea.vmem [#allocation2], %s473
          %s475 = smul.u32 8, %s36
          %s477 = ssub.s32 2048, 2048
          %478 = vsyncadd %s471, %s477
          %s479 = smul.addr %s475, 2
          %s480 = smul.addr %s35, 32
          %s481 = sadd.s32 %s479, %s480
          %s482 = smul.addr %s481, 128
          %s483 = scalar_lea.hbm %s0, %s482
          %s484 = sshll.u32 %s474, 4
          %s485 = int_to_ptr.vmem [resolvable:$true] %s484
          %490 = dma.hbm_to_vmem [thread:$0]  %s483, 2048, %s485, %s471, 128, 128, 8
        $region60: #{tpu_custom_call.1} parent=55 // pred_fallthru
          _
        // Predicated region
        $region61: #{tpu_custom_call.1} parent=55 // pred_check
          %p491 = pneg %p90
        $region62: #{tpu_custom_call.1} parent=55 // pred_check_branch
          %493 = sbr.rel (%p491) target = $region64
        $region63: #{tpu_custom_call.1} parent=55 // pred_region
          %s494 = sand.u32 %s80, 1
          %s495 = scalar_lea.sflag [#allocation5], %s494
          %s496 = sand.u32 %s80, 1
          %s497 = smul.addr %s496, 128
          %s498 = scalar_lea.vmem [#allocation4], %s497
          %s500 = ssub.s32 2048, 2048
          %501 = vsyncadd %s495, %s500
          %s502 = smul.addr %s35, 32
          %s503 = sadd.s32 %s36, %s502
          %s504 = smul.addr %s503, 128
          %s505 = scalar_lea.hbm %s1, %s504
          %s506 = sshll.u32 %s498, 4
          %s507 = int_to_ptr.vmem [resolvable:$true] %s506
          %512 = dma.hbm_to_vmem [thread:$0]  %s505, 2048, %s507, %s495, 256, 128, 8
        $region64: #{tpu_custom_call.1} parent=55 // pred_fallthru
          _
      $region56: #{tpu_custom_call.1} parent=5 // pred_fallthru
        _
      %p513 = scmp.le.s32.totalorder 1, %s28
      %p514 = scmp.lt.s32.totalorder %s28, 5
      %p515 = pnand %p513, %p514
      %p516 = pneg %p515
      // Predicated region
      $region65: #{tpu_custom_call.1} parent=5 // pred_check
        _
      $region66: #{tpu_custom_call.1} parent=5 // pred_check_branch
        %518 = sbr.rel (%p515) target = $region68
      $region67: #{tpu_custom_call.1} parent=5 // pred_region
        %s519 = ssub.s32 %s28, 1
        %s520 = sand.u32 %s55, 1
        %s521 = scalar_lea.sflag [#allocation3], %s520
        %s522 = sand.u32 %s55, 1
        %s523 = smul.addr %s522, 128
        %s524 = scalar_lea.vmem [#allocation2], %s523
        // Predicated region
        $region69: #{tpu_custom_call.1} parent=67 // pred_check
          %p525 = pneg %p68
        $region70: #{tpu_custom_call.1} parent=67 // pred_check_branch
          %527 = sbr.rel (%p525) target = $region72
        $region71: #{tpu_custom_call.1} parent=67 // pred_region
          %528 = dma.done %s521, 2048
        $region72: #{tpu_custom_call.1} parent=67 // pred_fallthru
          _
        %s529 = sand.u32 %s83, 1
        %s530 = scalar_lea.sflag [#allocation5], %s529
        %s531 = sand.u32 %s83, 1
        %s532 = smul.addr %s531, 128
        %s533 = scalar_lea.vmem [#allocation4], %s532
        // Predicated region
        $region73: #{tpu_custom_call.1} parent=67 // pred_check
          %p534 = pneg %p96
        $region74: #{tpu_custom_call.1} parent=67 // pred_check_branch
          %536 = sbr.rel (%p534) target = $region76
        $region75: #{tpu_custom_call.1} parent=67 // pred_region
          %537 = dma.done %s530, 2048
        $region76: #{tpu_custom_call.1} parent=67 // pred_fallthru
          _
        %s538 = sand.u32 %s55, 1
        %s539 = scalar_lea.sflag [#allocation3], %s538
        %s540 = sand.u32 %s55, 1
        %s541 = smul.addr %s540, 128
        %s542 = scalar_lea.vmem [#allocation2], %s541
        %p543 = pneg %p68
        %p544 = pneg %p65
        %s545 = sand.u32 %s83, 1
        %s546 = scalar_lea.sflag [#allocation5], %s545
        %s547 = sand.u32 %s83, 1
        %s548 = smul.addr %s547, 128
        %s549 = scalar_lea.vmem [#allocation4], %s548
        %p550 = pneg %p96
        %p551 = pneg %p93
        %p552 = pneg %p117
        %p553 = pneg %p114
        %p554 = pneg %p138
        %p555 = pneg %p135
        %p556 = pneg %p159
        %p557 = pneg %p156
        %p558 = pneg %p180
        %p559 = pneg %p177
        %p560 = pneg %p201
        %p561 = pneg %p198
        %p562 = pneg %p222
        %p563 = pneg %p219
        %p564 = pneg %p243
        %p565 = pneg %p240
        %p566 = pneg %p264
        %p567 = pneg %p261
        %p568 = pneg %p285
        %p569 = pneg %p282
        %p570 = pneg %p306
        %p571 = pneg %p303
        %p572 = pneg %p334
        %p573 = pneg %p331
        %s574 = sand.u32 %s321, 1
        %s575 = sand.u32 %s321, 1
        %s576 = smul.addr %s575, 40
        %s577 = scalar_lea.vmem [#allocation6], %s576
        %p578 = pneg %p362
        %p579 = pneg %p359
        %s580 = sand.u32 %s349, 1
        %s581 = sand.u32 %s349, 1
        %s582 = smul.addr %s581, 24
        %s583 = scalar_lea.vmem [#allocation7], %s582
        %p584 = pneg %p390
        %p585 = pneg %p387
        %s586 = sand.u32 %s377, 1
        %s587 = sand.u32 %s377, 1
        %s588 = smul.addr %s587, 40
        %s589 = scalar_lea.vmem [#allocation8], %s588
        %p590 = pneg %p418
        %p591 = pneg %p415
        %s592 = sand.u32 %s405, 1
        %s593 = sand.u32 %s405, 1
        %s594 = smul.addr %s593, 40
        %s595 = scalar_lea.vmem [#allocation9], %s594
        %s596 = smul.u32 8, %s38
        %v597 = vld [vmem:[%s2] sm:$0x1]
        %v598 = vld [vmem:[%s3] sm:$0x1]
        %v599 = vld [vmem:[%s524] sm:$0xff]
        %v600 = vld [vmem:[%s524 + $0x8] sm:$0xff]
        %v601 = vld [vmem:[%s524 + $0x10] sm:$0xff]
        %v602 = vld [vmem:[%s524 + $0x18] sm:$0xff]
        %v603 = vld [vmem:[%s524 + $0x20] sm:$0xff]
        %v604 = vld [vmem:[%s524 + $0x28] sm:$0xff]
        %v605 = vld [vmem:[%s524 + $0x30] sm:$0xff]
        %v606 = vld [vmem:[%s524 + $0x38] sm:$0xff]
        %v607 = vld [vmem:[%s524 + $0x40] sm:$0xff]
        %v608 = vld [vmem:[%s524 + $0x48] sm:$0xff]
        %v609 = vld [vmem:[%s524 + $0x50] sm:$0xff]
        %v610 = vld [vmem:[%s524 + $0x58] sm:$0xff]
        %v611 = vld [vmem:[%s524 + $0x60] sm:$0xff]
        %v612 = vld [vmem:[%s524 + $0x68] sm:$0xff]
        %v613 = vld [vmem:[%s524 + $0x70] sm:$0xff]
        %v614 = vld [vmem:[%s524 + $0x78] sm:$0xff]
        %vm615 = vcmask 261120
        %v616 = vsel %vm615, %v599, 0.0
        %617 = vadd.xlane.f32.xlu0 %v616
        %v618 = vpop.xlane.xlu0 %617
        %v619 = vsel %vm615, %v600, 0.0
        %620 = vadd.xlane.f32.xlu0 %v619
        %v621 = vpop.xlane.xlu0 %620
        %v622 = vsel %vm615, %v601, 0.0
        %623 = vadd.xlane.f32.xlu0 %v622
        %v624 = vpop.xlane.xlu0 %623
        %v625 = vsel %vm615, %v602, 0.0
        %626 = vadd.xlane.f32.xlu0 %v625
        %v627 = vpop.xlane.xlu0 %626
        %v628 = vsel %vm615, %v603, 0.0
        %629 = vadd.xlane.f32.xlu0 %v628
        %v630 = vpop.xlane.xlu0 %629
        %v631 = vsel %vm615, %v604, 0.0
        %632 = vadd.xlane.f32.xlu0 %v631
        %v633 = vpop.xlane.xlu0 %632
        %v634 = vsel %vm615, %v605, 0.0
        %635 = vadd.xlane.f32.xlu0 %v634
        %v636 = vpop.xlane.xlu0 %635
        %v637 = vsel %vm615, %v606, 0.0
        %638 = vadd.xlane.f32.xlu0 %v637
        %v639 = vpop.xlane.xlu0 %638
        %v640 = vsel %vm615, %v607, 0.0
        %641 = vadd.xlane.f32.xlu0 %v640
        %v642 = vpop.xlane.xlu0 %641
        %v643 = vsel %vm615, %v608, 0.0
        %644 = vadd.xlane.f32.xlu0 %v643
        %v645 = vpop.xlane.xlu0 %644
        %v646 = vsel %vm615, %v609, 0.0
        %647 = vadd.xlane.f32.xlu0 %v646
        %v648 = vpop.xlane.xlu0 %647
        %v649 = vsel %vm615, %v610, 0.0
        %650 = vadd.xlane.f32.xlu0 %v649
        %v651 = vpop.xlane.xlu0 %650
        %v652 = vsel %vm615, %v611, 0.0
        %653 = vadd.xlane.f32.xlu0 %v652
        %v654 = vpop.xlane.xlu0 %653
        %v655 = vsel %vm615, %v612, 0.0
        %656 = vadd.xlane.f32.xlu0 %v655
        %v657 = vpop.xlane.xlu0 %656
        %v658 = vsel %vm615, %v613, 0.0
        %659 = vadd.xlane.f32.xlu0 %v658
        %v660 = vpop.xlane.xlu0 %659
        %v661 = vsel %vm615, %v614, 0.0
        %662 = vadd.xlane.f32.xlu0 %v661
        %v663 = vpop.xlane.xlu0 %662
        %v664 = vrcp.pop 32.0
        %v665 = vmul.f32 %v618, %v664
        %v666 = vmul.f32 %v621, %v664
        %v667 = vmul.f32 %v624, %v664
        %v668 = vmul.f32 %v627, %v664
        %v669 = vmul.f32 %v630, %v664
        %v670 = vmul.f32 %v633, %v664
        %v671 = vmul.f32 %v636, %v664
        %v672 = vmul.f32 %v639, %v664
        %v673 = vmul.f32 %v642, %v664
        %v674 = vmul.f32 %v645, %v664
        %v675 = vmul.f32 %v648, %v664
        %v676 = vmul.f32 %v651, %v664
        %v677 = vmul.f32 %v654, %v664
        %v678 = vmul.f32 %v657, %v664
        %v679 = vmul.f32 %v660, %v664
        %v680 = vmul.f32 %v663, %v664
        %v681 = vmul.f32 %v599, %v599
        %v682 = vmul.f32 %v600, %v600
        %v683 = vmul.f32 %v601, %v601
        %v684 = vmul.f32 %v602, %v602
        %v685 = vmul.f32 %v603, %v603
        %v686 = vmul.f32 %v604, %v604
        %v687 = vmul.f32 %v605, %v605
        %v688 = vmul.f32 %v606, %v606
        %v689 = vmul.f32 %v607, %v607
        %v690 = vmul.f32 %v608, %v608
        %v691 = vmul.f32 %v609, %v609
        %v692 = vmul.f32 %v610, %v610
        %v693 = vmul.f32 %v611, %v611
        %v694 = vmul.f32 %v612, %v612
        %v695 = vmul.f32 %v613, %v613
        %v696 = vmul.f32 %v614, %v614
        %v697 = vsel %vm615, %v681, 0.0
        %698 = vadd.xlane.f32.xlu0 %v697
        %v699 = vpop.xlane.xlu0 %698
        %v700 = vsel %vm615, %v682, 0.0
        %701 = vadd.xlane.f32.xlu0 %v700
        %v702 = vpop.xlane.xlu0 %701
        %v703 = vsel %vm615, %v683, 0.0
        %704 = vadd.xlane.f32.xlu0 %v703
        %v705 = vpop.xlane.xlu0 %704
        %v706 = vsel %vm615, %v684, 0.0
        %707 = vadd.xlane.f32.xlu0 %v706
        %v708 = vpop.xlane.xlu0 %707
        %v709 = vsel %vm615, %v685, 0.0
        %710 = vadd.xlane.f32.xlu0 %v709
        %v711 = vpop.xlane.xlu0 %710
        %v712 = vsel %vm615, %v686, 0.0
        %713 = vadd.xlane.f32.xlu0 %v712
        %v714 = vpop.xlane.xlu0 %713
        %v715 = vsel %vm615, %v687, 0.0
        %716 = vadd.xlane.f32.xlu0 %v715
        %v717 = vpop.xlane.xlu0 %716
        %v718 = vsel %vm615, %v688, 0.0
        %719 = vadd.xlane.f32.xlu0 %v718
        %v720 = vpop.xlane.xlu0 %719
        %v721 = vsel %vm615, %v689, 0.0
        %722 = vadd.xlane.f32.xlu0 %v721
        %v723 = vpop.xlane.xlu0 %722
        %v724 = vsel %vm615, %v690, 0.0
        %725 = vadd.xlane.f32.xlu0 %v724
        %v726 = vpop.xlane.xlu0 %725
        %v727 = vsel %vm615, %v691, 0.0
        %728 = vadd.xlane.f32.xlu0 %v727
        %v729 = vpop.xlane.xlu0 %728
        %v730 = vsel %vm615, %v692, 0.0
        %731 = vadd.xlane.f32.xlu0 %v730
        %v732 = vpop.xlane.xlu0 %731
        %v733 = vsel %vm615, %v693, 0.0
        %734 = vadd.xlane.f32.xlu0 %v733
        %v735 = vpop.xlane.xlu0 %734
        %v736 = vsel %vm615, %v694, 0.0
        %737 = vadd.xlane.f32.xlu0 %v736
        %v738 = vpop.xlane.xlu0 %737
        %v739 = vsel %vm615, %v695, 0.0
        %740 = vadd.xlane.f32.xlu0 %v739
        %v741 = vpop.xlane.xlu0 %740
        %v742 = vsel %vm615, %v696, 0.0
        %743 = vadd.xlane.f32.xlu0 %v742
        %v744 = vpop.xlane.xlu0 %743
        %v745 = vmul.f32 %v699, %v664
        %v746 = vmul.f32 %v702, %v664
        %v747 = vmul.f32 %v705, %v664
        %v748 = vmul.f32 %v708, %v664
        %v749 = vmul.f32 %v711, %v664
        %v750 = vmul.f32 %v714, %v664
        %v751 = vmul.f32 %v717, %v664
        %v752 = vmul.f32 %v720, %v664
        %v753 = vmul.f32 %v723, %v664
        %v754 = vmul.f32 %v726, %v664
        %v755 = vmul.f32 %v729, %v664
        %v756 = vmul.f32 %v732, %v664
        %v757 = vmul.f32 %v735, %v664
        %v758 = vmul.f32 %v738, %v664
        %v759 = vmul.f32 %v741, %v664
        %v760 = vmul.f32 %v744, %v664
        %v761 = vmul.f32 %v665, %v665
        %v762 = vmul.f32 %v666, %v666
        %v763 = vmul.f32 %v667, %v667
        %v764 = vmul.f32 %v668, %v668
        %v765 = vmul.f32 %v669, %v669
        %v766 = vmul.f32 %v670, %v670
        %v767 = vmul.f32 %v671, %v671
        %v768 = vmul.f32 %v672, %v672
        %v769 = vmul.f32 %v673, %v673
        %v770 = vmul.f32 %v674, %v674
        %v771 = vmul.f32 %v675, %v675
        %v772 = vmul.f32 %v676, %v676
        %v773 = vmul.f32 %v677, %v677
        %v774 = vmul.f32 %v678, %v678
        %v775 = vmul.f32 %v679, %v679
        %v776 = vmul.f32 %v680, %v680
        %v777 = vsub.f32 %v745, %v761
        %v778 = vsub.f32 %v746, %v762
        %v779 = vsub.f32 %v747, %v763
        %v780 = vsub.f32 %v748, %v764
        %v781 = vsub.f32 %v749, %v765
        %v782 = vsub.f32 %v750, %v766
        %v783 = vsub.f32 %v751, %v767
        %v784 = vsub.f32 %v752, %v768
        %v785 = vsub.f32 %v753, %v769
        %v786 = vsub.f32 %v754, %v770
        %v787 = vsub.f32 %v755, %v771
        %v788 = vsub.f32 %v756, %v772
        %v789 = vsub.f32 %v757, %v773
        %v790 = vsub.f32 %v758, %v774
        %v791 = vsub.f32 %v759, %v775
        %v792 = vsub.f32 %v760, %v776
        %v793 = vmax.f32 %v777, 0.0
        %v794 = vmax.f32 %v778, 0.0
        %v795 = vmax.f32 %v779, 0.0
        %v796 = vmax.f32 %v780, 0.0
        %v797 = vmax.f32 %v781, 0.0
        %v798 = vmax.f32 %v782, 0.0
        %v799 = vmax.f32 %v783, 0.0
        %v800 = vmax.f32 %v784, 0.0
        %v801 = vmax.f32 %v785, 0.0
        %v802 = vmax.f32 %v786, 0.0
        %v803 = vmax.f32 %v787, 0.0
        %v804 = vmax.f32 %v788, 0.0
        %v805 = vmax.f32 %v789, 0.0
        %v806 = vmax.f32 %v790, 0.0
        %v807 = vmax.f32 %v791, 0.0
        %v808 = vmax.f32 %v792, 0.0
        %v809 = vsub.f32 %v599, %v665
        %v810 = vsub.f32 %v600, %v666
        %v811 = vsub.f32 %v601, %v667
        %v812 = vsub.f32 %v602, %v668
        %v813 = vsub.f32 %v603, %v669
        %v814 = vsub.f32 %v604, %v670
        %v815 = vsub.f32 %v605, %v671
        %v816 = vsub.f32 %v606, %v672
        %v817 = vsub.f32 %v607, %v673
        %v818 = vsub.f32 %v608, %v674
        %v819 = vsub.f32 %v609, %v675
        %v820 = vsub.f32 %v610, %v676
        %v821 = vsub.f32 %v611, %v677
        %v822 = vsub.f32 %v612, %v678
        %v823 = vsub.f32 %v613, %v679
        %v824 = vsub.f32 %v614, %v680
        %v825 = vadd.f32 %v793, 1e-05
        %v826 = vadd.f32 %v794, 1e-05
        %v827 = vadd.f32 %v795, 1e-05
        %v828 = vadd.f32 %v796, 1e-05
        %v829 = vadd.f32 %v797, 1e-05
        %v830 = vadd.f32 %v798, 1e-05
        %v831 = vadd.f32 %v799, 1e-05
        %v832 = vadd.f32 %v800, 1e-05
        %v833 = vadd.f32 %v801, 1e-05
        %v834 = vadd.f32 %v802, 1e-05
        %v835 = vadd.f32 %v803, 1e-05
        %v836 = vadd.f32 %v804, 1e-05
        %v837 = vadd.f32 %v805, 1e-05
        %v838 = vadd.f32 %v806, 1e-05
        %v839 = vadd.f32 %v807, 1e-05
        %v840 = vadd.f32 %v808, 1e-05
        %v841 = vrsqrt.pop %v825
        %v842 = vrsqrt.pop %v826
        %v843 = vrsqrt.pop %v827
        %v844 = vrsqrt.pop %v828
        %v845 = vrsqrt.pop %v829
        %v846 = vrsqrt.pop %v830
        %v847 = vrsqrt.pop %v831
        %v848 = vrsqrt.pop %v832
        %v849 = vrsqrt.pop %v833
        %v850 = vrsqrt.pop %v834
        %v851 = vrsqrt.pop %v835
        %v852 = vrsqrt.pop %v836
        %v853 = vrsqrt.pop %v837
        %v854 = vrsqrt.pop %v838
        %v855 = vrsqrt.pop %v839
        %v856 = vrsqrt.pop %v840
        %v857 = vmul.f32 %v809, %v841
        %v858 = vmul.f32 %v810, %v842
        %v859 = vmul.f32 %v811, %v843
        %v860 = vmul.f32 %v812, %v844
        %v861 = vmul.f32 %v813, %v845
        %v862 = vmul.f32 %v814, %v846
        %v863 = vmul.f32 %v815, %v847
        %v864 = vmul.f32 %v816, %v848
        %v865 = vmul.f32 %v817, %v849
        %v866 = vmul.f32 %v818, %v850
        %v867 = vmul.f32 %v819, %v851
        %v868 = vmul.f32 %v820, %v852
        %v869 = vmul.f32 %v821, %v853
        %v870 = vmul.f32 %v822, %v854
        %v871 = vmul.f32 %v823, %v855
        %v872 = vmul.f32 %v824, %v856
        %v874 = vlaneseq
        %v875 = vshrl.u32 %v874, 7
        %v876 = vsub.s32 0, %v875
        %v877 = vrot.slane %v597, %v876
        %v879 = vmul.f32 %v857, %v877
        %v880 = vmul.f32 %v858, %v877
        %v881 = vmul.f32 %v859, %v877
        %v882 = vmul.f32 %v860, %v877
        %v883 = vmul.f32 %v861, %v877
        %v884 = vmul.f32 %v862, %v877
        %v885 = vmul.f32 %v863, %v877
        %v886 = vmul.f32 %v864, %v877
        %v887 = vmul.f32 %v865, %v877
        %v888 = vmul.f32 %v866, %v877
        %v889 = vmul.f32 %v867, %v877
        %v890 = vmul.f32 %v868, %v877
        %v891 = vmul.f32 %v869, %v877
        %v892 = vmul.f32 %v870, %v877
        %v893 = vmul.f32 %v871, %v877
        %v894 = vmul.f32 %v872, %v877
        %v896 = vlaneseq
        %v897 = vshrl.u32 %v896, 7
        %v898 = vsub.s32 0, %v897
        %v899 = vrot.slane %v598, %v898
        %v901 = vadd.f32 %v879, %v899
        %v902 = vadd.f32 %v880, %v899
        %v903 = vadd.f32 %v881, %v899
        %v904 = vadd.f32 %v882, %v899
        %v905 = vadd.f32 %v883, %v899
        %v906 = vadd.f32 %v884, %v899
        %v907 = vadd.f32 %v885, %v899
        %v908 = vadd.f32 %v886, %v899
        %v909 = vadd.f32 %v887, %v899
        %v910 = vadd.f32 %v888, %v899
        %v911 = vadd.f32 %v889, %v899
        %v912 = vadd.f32 %v890, %v899
        %v913 = vadd.f32 %v891, %v899
        %v914 = vadd.f32 %v892, %v899
        %v915 = vadd.f32 %v893, %v899
        %v916 = vadd.f32 %v894, %v899
        %v917 = vld [vmem:[%s533] sm:$0xff]
        %v918 = vld [vmem:[%s533 + $0x8] sm:$0xff]
        %v919 = vld [vmem:[%s533 + $0x10] sm:$0xff]
        %v920 = vld [vmem:[%s533 + $0x18] sm:$0xff]
        %v921 = vld [vmem:[%s533 + $0x20] sm:$0xff]
        %v922 = vld [vmem:[%s533 + $0x28] sm:$0xff]
        %v923 = vld [vmem:[%s533 + $0x30] sm:$0xff]
        %v924 = vld [vmem:[%s533 + $0x38] sm:$0xff]
        %v925 = vld [vmem:[%s533 + $0x40] sm:$0xff]
        %v926 = vld [vmem:[%s533 + $0x48] sm:$0xff]
        %v927 = vld [vmem:[%s533 + $0x50] sm:$0xff]
        %v928 = vld [vmem:[%s533 + $0x58] sm:$0xff]
        %v929 = vld [vmem:[%s533 + $0x60] sm:$0xff]
        %v930 = vld [vmem:[%s533 + $0x68] sm:$0xff]
        %v931 = vld [vmem:[%s533 + $0x70] sm:$0xff]
        %v932 = vld [vmem:[%s533 + $0x78] sm:$0xff]
        %v933 = vsel %vm615, %v917, 0.0
        %934 = vadd.xlane.f32.xlu0 %v933
        %v935 = vpop.xlane.xlu0 %934
        %v936 = vsel %vm615, %v918, 0.0
        %937 = vadd.xlane.f32.xlu0 %v936
        %v938 = vpop.xlane.xlu0 %937
        %v939 = vsel %vm615, %v919, 0.0
        %940 = vadd.xlane.f32.xlu0 %v939
        %v941 = vpop.xlane.xlu0 %940
        %v942 = vsel %vm615, %v920, 0.0
        %943 = vadd.xlane.f32.xlu0 %v942
        %v944 = vpop.xlane.xlu0 %943
        %v945 = vsel %vm615, %v921, 0.0
        %946 = vadd.xlane.f32.xlu0 %v945
        %v947 = vpop.xlane.xlu0 %946
        %v948 = vsel %vm615, %v922, 0.0
        %949 = vadd.xlane.f32.xlu0 %v948
        %v950 = vpop.xlane.xlu0 %949
        %v951 = vsel %vm615, %v923, 0.0
        %952 = vadd.xlane.f32.xlu0 %v951
        %v953 = vpop.xlane.xlu0 %952
        %v954 = vsel %vm615, %v924, 0.0
        %955 = vadd.xlane.f32.xlu0 %v954
        %v956 = vpop.xlane.xlu0 %955
        %v957 = vsel %vm615, %v925, 0.0
        %958 = vadd.xlane.f32.xlu0 %v957
        %v959 = vpop.xlane.xlu0 %958
        %v960 = vsel %vm615, %v926, 0.0
        %961 = vadd.xlane.f32.xlu0 %v960
        %v962 = vpop.xlane.xlu0 %961
        %v963 = vsel %vm615, %v927, 0.0
        %964 = vadd.xlane.f32.xlu0 %v963
        %v965 = vpop.xlane.xlu0 %964
        %v966 = vsel %vm615, %v928, 0.0
        %967 = vadd.xlane.f32.xlu0 %v966
        %v968 = vpop.xlane.xlu0 %967
        %v969 = vsel %vm615, %v929, 0.0
        %970 = vadd.xlane.f32.xlu0 %v969
        %v971 = vpop.xlane.xlu0 %970
        %v972 = vsel %vm615, %v930, 0.0
        %973 = vadd.xlane.f32.xlu0 %v972
        %v974 = vpop.xlane.xlu0 %973
        %v975 = vsel %vm615, %v931, 0.0
        %976 = vadd.xlane.f32.xlu0 %v975
        %v977 = vpop.xlane.xlu0 %976
        %v978 = vsel %vm615, %v932, 0.0
        %979 = vadd.xlane.f32.xlu0 %v978
        %v980 = vpop.xlane.xlu0 %979
        %v981 = vmul.f32 %v935, %v664
        %v982 = vmul.f32 %v938, %v664
        %v983 = vmul.f32 %v941, %v664
        %v984 = vmul.f32 %v944, %v664
        %v985 = vmul.f32 %v947, %v664
        %v986 = vmul.f32 %v950, %v664
        %v987 = vmul.f32 %v953, %v664
        %v988 = vmul.f32 %v956, %v664
        %v989 = vmul.f32 %v959, %v664
        %v990 = vmul.f32 %v962, %v664
        %v991 = vmul.f32 %v965, %v664
        %v992 = vmul.f32 %v968, %v664
        %v993 = vmul.f32 %v971, %v664
        %v994 = vmul.f32 %v974, %v664
        %v995 = vmul.f32 %v977, %v664
        %v996 = vmul.f32 %v980, %v664
        %v997 = vmul.f32 %v917, %v917
        %v998 = vmul.f32 %v918, %v918
        %v999 = vmul.f32 %v919, %v919
        %v1000 = vmul.f32 %v920, %v920
        %v1001 = vmul.f32 %v921, %v921
        %v1002 = vmul.f32 %v922, %v922
        %v1003 = vmul.f32 %v923, %v923
        %v1004 = vmul.f32 %v924, %v924
        %v1005 = vmul.f32 %v925, %v925
        %v1006 = vmul.f32 %v926, %v926
        %v1007 = vmul.f32 %v927, %v927
        %v1008 = vmul.f32 %v928, %v928
        %v1009 = vmul.f32 %v929, %v929
        %v1010 = vmul.f32 %v930, %v930
        %v1011 = vmul.f32 %v931, %v931
        %v1012 = vmul.f32 %v932, %v932
        %v1013 = vsel %vm615, %v997, 0.0
        %1014 = vadd.xlane.f32.xlu0 %v1013
        %v1015 = vpop.xlane.xlu0 %1014
        %v1016 = vsel %vm615, %v998, 0.0
        %1017 = vadd.xlane.f32.xlu0 %v1016
        %v1018 = vpop.xlane.xlu0 %1017
        %v1019 = vsel %vm615, %v999, 0.0
        %1020 = vadd.xlane.f32.xlu0 %v1019
        %v1021 = vpop.xlane.xlu0 %1020
        %v1022 = vsel %vm615, %v1000, 0.0
        %1023 = vadd.xlane.f32.xlu0 %v1022
        %v1024 = vpop.xlane.xlu0 %1023
        %v1025 = vsel %vm615, %v1001, 0.0
        %1026 = vadd.xlane.f32.xlu0 %v1025
        %v1027 = vpop.xlane.xlu0 %1026
        %v1028 = vsel %vm615, %v1002, 0.0
        %1029 = vadd.xlane.f32.xlu0 %v1028
        %v1030 = vpop.xlane.xlu0 %1029
        %v1031 = vsel %vm615, %v1003, 0.0
        %1032 = vadd.xlane.f32.xlu0 %v1031
        %v1033 = vpop.xlane.xlu0 %1032
        %v1034 = vsel %vm615, %v1004, 0.0
        %1035 = vadd.xlane.f32.xlu0 %v1034
        %v1036 = vpop.xlane.xlu0 %1035
        %v1037 = vsel %vm615, %v1005, 0.0
        %1038 = vadd.xlane.f32.xlu0 %v1037
        %v1039 = vpop.xlane.xlu0 %1038
        %v1040 = vsel %vm615, %v1006, 0.0
        %1041 = vadd.xlane.f32.xlu0 %v1040
        %v1042 = vpop.xlane.xlu0 %1041
        %v1043 = vsel %vm615, %v1007, 0.0
        %1044 = vadd.xlane.f32.xlu0 %v1043
        %v1045 = vpop.xlane.xlu0 %1044
        %v1046 = vsel %vm615, %v1008, 0.0
        %1047 = vadd.xlane.f32.xlu0 %v1046
        %v1048 = vpop.xlane.xlu0 %1047
        %v1049 = vsel %vm615, %v1009, 0.0
        %1050 = vadd.xlane.f32.xlu0 %v1049
        %v1051 = vpop.xlane.xlu0 %1050
        %v1052 = vsel %vm615, %v1010, 0.0
        %1053 = vadd.xlane.f32.xlu0 %v1052
        %v1054 = vpop.xlane.xlu0 %1053
        %v1055 = vsel %vm615, %v1011, 0.0
        %1056 = vadd.xlane.f32.xlu0 %v1055
        %v1057 = vpop.xlane.xlu0 %1056
        %v1058 = vsel %vm615, %v1012, 0.0
        %1059 = vadd.xlane.f32.xlu0 %v1058
        %v1060 = vpop.xlane.xlu0 %1059
        %v1061 = vmul.f32 %v1015, %v664
        %v1062 = vmul.f32 %v1018, %v664
        %v1063 = vmul.f32 %v1021, %v664
        %v1064 = vmul.f32 %v1024, %v664
        %v1065 = vmul.f32 %v1027, %v664
        %v1066 = vmul.f32 %v1030, %v664
        %v1067 = vmul.f32 %v1033, %v664
        %v1068 = vmul.f32 %v1036, %v664
        %v1069 = vmul.f32 %v1039, %v664
        %v1070 = vmul.f32 %v1042, %v664
        %v1071 = vmul.f32 %v1045, %v664
        %v1072 = vmul.f32 %v1048, %v664
        %v1073 = vmul.f32 %v1051, %v664
        %v1074 = vmul.f32 %v1054, %v664
        %v1075 = vmul.f32 %v1057, %v664
        %v1076 = vmul.f32 %v1060, %v664
        %v1077 = vmul.f32 %v981, %v981
        %v1078 = vmul.f32 %v982, %v982
        %v1079 = vmul.f32 %v983, %v983
        %v1080 = vmul.f32 %v984, %v984
        %v1081 = vmul.f32 %v985, %v985
        %v1082 = vmul.f32 %v986, %v986
        %v1083 = vmul.f32 %v987, %v987
        %v1084 = vmul.f32 %v988, %v988
        %v1085 = vmul.f32 %v989, %v989
        %v1086 = vmul.f32 %v990, %v990
        %v1087 = vmul.f32 %v991, %v991
        %v1088 = vmul.f32 %v992, %v992
        %v1089 = vmul.f32 %v993, %v993
        %v1090 = vmul.f32 %v994, %v994
        %v1091 = vmul.f32 %v995, %v995
        %v1092 = vmul.f32 %v996, %v996
        %v1093 = vsub.f32 %v1061, %v1077
        %v1094 = vsub.f32 %v1062, %v1078
        %v1095 = vsub.f32 %v1063, %v1079
        %v1096 = vsub.f32 %v1064, %v1080
        %v1097 = vsub.f32 %v1065, %v1081
        %v1098 = vsub.f32 %v1066, %v1082
        %v1099 = vsub.f32 %v1067, %v1083
        %v1100 = vsub.f32 %v1068, %v1084
        %v1101 = vsub.f32 %v1069, %v1085
        %v1102 = vsub.f32 %v1070, %v1086
        %v1103 = vsub.f32 %v1071, %v1087
        %v1104 = vsub.f32 %v1072, %v1088
        %v1105 = vsub.f32 %v1073, %v1089
        %v1106 = vsub.f32 %v1074, %v1090
        %v1107 = vsub.f32 %v1075, %v1091
        %v1108 = vsub.f32 %v1076, %v1092
        %v1109 = vmax.f32 %v1093, 0.0
        %v1110 = vmax.f32 %v1094, 0.0
        %v1111 = vmax.f32 %v1095, 0.0
        %v1112 = vmax.f32 %v1096, 0.0
        %v1113 = vmax.f32 %v1097, 0.0
        %v1114 = vmax.f32 %v1098, 0.0
        %v1115 = vmax.f32 %v1099, 0.0
        %v1116 = vmax.f32 %v1100, 0.0
        %v1117 = vmax.f32 %v1101, 0.0
        %v1118 = vmax.f32 %v1102, 0.0
        %v1119 = vmax.f32 %v1103, 0.0
        %v1120 = vmax.f32 %v1104, 0.0
        %v1121 = vmax.f32 %v1105, 0.0
        %v1122 = vmax.f32 %v1106, 0.0
        %v1123 = vmax.f32 %v1107, 0.0
        %v1124 = vmax.f32 %v1108, 0.0
        %v1125 = vsub.f32 %v917, %v981
        %v1126 = vsub.f32 %v918, %v982
        %v1127 = vsub.f32 %v919, %v983
        %v1128 = vsub.f32 %v920, %v984
        %v1129 = vsub.f32 %v921, %v985
        %v1130 = vsub.f32 %v922, %v986
        %v1131 = vsub.f32 %v923, %v987
        %v1132 = vsub.f32 %v924, %v988
        %v1133 = vsub.f32 %v925, %v989
        %v1134 = vsub.f32 %v926, %v990
        %v1135 = vsub.f32 %v927, %v991
        %v1136 = vsub.f32 %v928, %v992
        %v1137 = vsub.f32 %v929, %v993
        %v1138 = vsub.f32 %v930, %v994
        %v1139 = vsub.f32 %v931, %v995
        %v1140 = vsub.f32 %v932, %v996
        %v1141 = vadd.f32 %v1109, 1e-05
        %v1142 = vadd.f32 %v1110, 1e-05
        %v1143 = vadd.f32 %v1111, 1e-05
        %v1144 = vadd.f32 %v1112, 1e-05
        %v1145 = vadd.f32 %v1113, 1e-05
        %v1146 = vadd.f32 %v1114, 1e-05
        %v1147 = vadd.f32 %v1115, 1e-05
        %v1148 = vadd.f32 %v1116, 1e-05
        %v1149 = vadd.f32 %v1117, 1e-05
        %v1150 = vadd.f32 %v1118, 1e-05
        %v1151 = vadd.f32 %v1119, 1e-05
        %v1152 = vadd.f32 %v1120, 1e-05
        %v1153 = vadd.f32 %v1121, 1e-05
        %v1154 = vadd.f32 %v1122, 1e-05
        %v1155 = vadd.f32 %v1123, 1e-05
        %v1156 = vadd.f32 %v1124, 1e-05
        %v1157 = vrsqrt.pop %v1141
        %v1158 = vrsqrt.pop %v1142
        %v1159 = vrsqrt.pop %v1143
        %v1160 = vrsqrt.pop %v1144
        %v1161 = vrsqrt.pop %v1145
        %v1162 = vrsqrt.pop %v1146
        %v1163 = vrsqrt.pop %v1147
        %v1164 = vrsqrt.pop %v1148
        %v1165 = vrsqrt.pop %v1149
        %v1166 = vrsqrt.pop %v1150
        %v1167 = vrsqrt.pop %v1151
        %v1168 = vrsqrt.pop %v1152
        %v1169 = vrsqrt.pop %v1153
        %v1170 = vrsqrt.pop %v1154
        %v1171 = vrsqrt.pop %v1155
        %v1172 = vrsqrt.pop %v1156
        %v1173 = vmul.f32 %v1125, %v1157
        %v1174 = vmul.f32 %v1126, %v1158
        %v1175 = vmul.f32 %v1127, %v1159
        %v1176 = vmul.f32 %v1128, %v1160
        %v1177 = vmul.f32 %v1129, %v1161
        %v1178 = vmul.f32 %v1130, %v1162
        %v1179 = vmul.f32 %v1131, %v1163
        %v1180 = vmul.f32 %v1132, %v1164
        %v1181 = vmul.f32 %v1133, %v1165
        %v1182 = vmul.f32 %v1134, %v1166
        %v1183 = vmul.f32 %v1135, %v1167
        %v1184 = vmul.f32 %v1136, %v1168
        %v1185 = vmul.f32 %v1137, %v1169
        %v1186 = vmul.f32 %v1138, %v1170
        %v1187 = vmul.f32 %v1139, %v1171
        %v1188 = vmul.f32 %v1140, %v1172
        %v1189 = vmul.f32 %v1173, %v877
        %v1190 = vmul.f32 %v1174, %v877
        %v1191 = vmul.f32 %v1175, %v877
        %v1192 = vmul.f32 %v1176, %v877
        %v1193 = vmul.f32 %v1177, %v877
        %v1194 = vmul.f32 %v1178, %v877
        %v1195 = vmul.f32 %v1179, %v877
        %v1196 = vmul.f32 %v1180, %v877
        %v1197 = vmul.f32 %v1181, %v877
        %v1198 = vmul.f32 %v1182, %v877
        %v1199 = vmul.f32 %v1183, %v877
        %v1200 = vmul.f32 %v1184, %v877
        %v1201 = vmul.f32 %v1185, %v877
        %v1202 = vmul.f32 %v1186, %v877
        %v1203 = vmul.f32 %v1187, %v877
        %v1204 = vmul.f32 %v1188, %v877
        %v1205 = vadd.f32 %v1189, %v899
        %v1206 = vadd.f32 %v1190, %v899
        %v1207 = vadd.f32 %v1191, %v899
        %v1208 = vadd.f32 %v1192, %v899
        %v1209 = vadd.f32 %v1193, %v899
        %v1210 = vadd.f32 %v1194, %v899
        %v1211 = vadd.f32 %v1195, %v899
        %v1212 = vadd.f32 %v1196, %v899
        %v1213 = vadd.f32 %v1197, %v899
        %v1214 = vadd.f32 %v1198, %v899
        %v1215 = vadd.f32 %v1199, %v899
        %v1216 = vadd.f32 %v1200, %v899
        %v1217 = vadd.f32 %v1201, %v899
        %v1218 = vadd.f32 %v1202, %v899
        %v1219 = vadd.f32 %v1203, %v899
        %v1220 = vadd.f32 %v1204, %v899
        %v1221 = vcombine.low %v1205, %v1207
        %v1222 = vcombine.high %v1205, %v1207
        %v1224 = vunpack.c.l.s4 1983009808
        %v1225 = vunpack.c.0.s8 %v1224
        %v1226 = vlaneseq
        %v1227 = vshrl.u32 %v1226, 7
        %v1228 = vsub.s32 %v1225, %v1227
        %v1229 = vrot.slane %v1221, %v1228
        %v1231 = vunpack.c.l.s4 1983009808
        %v1232 = vunpack.c.0.s8 %v1231
        %v1233 = vlaneseq
        %v1234 = vshrl.u32 %v1233, 7
        %v1235 = vsub.s32 %v1232, %v1234
        %v1236 = vrot.slane %v1222, %v1235
        %v1237 = vcombine.low %v1206, %v1208
        %v1238 = vcombine.high %v1206, %v1208
        %v1240 = vunpack.c.l.s4 1983009808
        %v1241 = vunpack.c.0.s8 %v1240
        %v1242 = vlaneseq
        %v1243 = vshrl.u32 %v1242, 7
        %v1244 = vsub.s32 %v1241, %v1243
        %v1245 = vrot.slane %v1237, %v1244
        %v1247 = vunpack.c.l.s4 1983009808
        %v1248 = vunpack.c.0.s8 %v1247
        %v1249 = vlaneseq
        %v1250 = vshrl.u32 %v1249, 7
        %v1251 = vsub.s32 %v1248, %v1250
        %v1252 = vrot.slane %v1238, %v1251
        %v1253 = vcombine.low %v1209, %v1211
        %v1254 = vcombine.high %v1209, %v1211
        %v1256 = vunpack.c.l.s4 1983009808
        %v1257 = vunpack.c.0.s8 %v1256
        %v1258 = vlaneseq
        %v1259 = vshrl.u32 %v1258, 7
        %v1260 = vsub.s32 %v1257, %v1259
        %v1261 = vrot.slane %v1253, %v1260
        %v1263 = vunpack.c.l.s4 1983009808
        %v1264 = vunpack.c.0.s8 %v1263
        %v1265 = vlaneseq
        %v1266 = vshrl.u32 %v1265, 7
        %v1267 = vsub.s32 %v1264, %v1266
        %v1268 = vrot.slane %v1254, %v1267
        %v1269 = vcombine.low %v1210, %v1212
        %v1270 = vcombine.high %v1210, %v1212
        %v1272 = vunpack.c.l.s4 1983009808
        %v1273 = vunpack.c.0.s8 %v1272
        %v1274 = vlaneseq
        %v1275 = vshrl.u32 %v1274, 7
        %v1276 = vsub.s32 %v1273, %v1275
        %v1277 = vrot.slane %v1269, %v1276
        %v1279 = vunpack.c.l.s4 1983009808
        %v1280 = vunpack.c.0.s8 %v1279
        %v1281 = vlaneseq
        %v1282 = vshrl.u32 %v1281, 7
        %v1283 = vsub.s32 %v1280, %v1282
        %v1284 = vrot.slane %v1270, %v1283
        %v1285 = vcombine.low %v1229, %v1245
        %v1286 = vcombine.high %v1229, %v1245
        %v1288 = vunpack.c.l.s4 1934713408
        %v1289 = vunpack.c.0.s8 %v1288
        %v1290 = vlaneseq
        %v1291 = vshrl.u32 %v1290, 7
        %v1292 = vsub.s32 %v1289, %v1291
        %v1293 = vrot.slane %v1285, %v1292
        %v1295 = vunpack.c.l.s4 1934713408
        %v1296 = vunpack.c.0.s8 %v1295
        %v1297 = vlaneseq
        %v1298 = vshrl.u32 %v1297, 7
        %v1299 = vsub.s32 %v1296, %v1298
        %v1300 = vrot.slane %v1286, %v1299
        %v1301 = vcombine.low %v1236, %v1252
        %v1302 = vcombine.high %v1236, %v1252
        %v1304 = vunpack.c.l.s4 1934713408
        %v1305 = vunpack.c.0.s8 %v1304
        %v1306 = vlaneseq
        %v1307 = vshrl.u32 %v1306, 7
        %v1308 = vsub.s32 %v1305, %v1307
        %v1309 = vrot.slane %v1301, %v1308
        %v1311 = vunpack.c.l.s4 1934713408
        %v1312 = vunpack.c.0.s8 %v1311
        %v1313 = vlaneseq
        %v1314 = vshrl.u32 %v1313, 7
        %v1315 = vsub.s32 %v1312, %v1314
        %v1316 = vrot.slane %v1302, %v1315
        %v1317 = vcombine.low %v1261, %v1277
        %v1318 = vcombine.high %v1261, %v1277
        %v1320 = vunpack.c.l.s4 1934713408
        %v1321 = vunpack.c.0.s8 %v1320
        %v1322 = vlaneseq
        %v1323 = vshrl.u32 %v1322, 7
        %v1324 = vsub.s32 %v1321, %v1323
        %v1325 = vrot.slane %v1317, %v1324
        %v1327 = vunpack.c.l.s4 1934713408
        %v1328 = vunpack.c.0.s8 %v1327
        %v1329 = vlaneseq
        %v1330 = vshrl.u32 %v1329, 7
        %v1331 = vsub.s32 %v1328, %v1330
        %v1332 = vrot.slane %v1318, %v1331
        %v1333 = vcombine.low %v1268, %v1284
        %v1334 = vcombine.high %v1268, %v1284
        %v1336 = vunpack.c.l.s4 1934713408
        %v1337 = vunpack.c.0.s8 %v1336
        %v1338 = vlaneseq
        %v1339 = vshrl.u32 %v1338, 7
        %v1340 = vsub.s32 %v1337, %v1339
        %v1341 = vrot.slane %v1333, %v1340
        %v1343 = vunpack.c.l.s4 1934713408
        %v1344 = vunpack.c.0.s8 %v1343
        %v1345 = vlaneseq
        %v1346 = vshrl.u32 %v1345, 7
        %v1347 = vsub.s32 %v1344, %v1346
        %v1348 = vrot.slane %v1334, %v1347
        %v1349 = vcombine.low %v1293, %v1325
        %v1350 = vcombine.high %v1293, %v1325
        %v1351 = vcombine.low %v1300, %v1332
        %v1352 = vcombine.high %v1300, %v1332
        %v1353 = vcombine.low %v1309, %v1341
        %v1354 = vcombine.high %v1309, %v1341
        %v1355 = vcombine.low %v1316, %v1348
        %v1356 = vcombine.high %v1316, %v1348
        %v1357 = vcombine.low %v1213, %v1215
        %v1358 = vcombine.high %v1213, %v1215
        %v1360 = vunpack.c.l.s4 1983009808
        %v1361 = vunpack.c.0.s8 %v1360
        %v1362 = vlaneseq
        %v1363 = vshrl.u32 %v1362, 7
        %v1364 = vsub.s32 %v1361, %v1363
        %v1365 = vrot.slane %v1357, %v1364
        %v1367 = vunpack.c.l.s4 1983009808
        %v1368 = vunpack.c.0.s8 %v1367
        %v1369 = vlaneseq
        %v1370 = vshrl.u32 %v1369, 7
        %v1371 = vsub.s32 %v1368, %v1370
        %v1372 = vrot.slane %v1358, %v1371
        %v1373 = vcombine.low %v1214, %v1216
        %v1374 = vcombine.high %v1214, %v1216
        %v1376 = vunpack.c.l.s4 1983009808
        %v1377 = vunpack.c.0.s8 %v1376
        %v1378 = vlaneseq
        %v1379 = vshrl.u32 %v1378, 7
        %v1380 = vsub.s32 %v1377, %v1379
        %v1381 = vrot.slane %v1373, %v1380
        %v1383 = vunpack.c.l.s4 1983009808
        %v1384 = vunpack.c.0.s8 %v1383
        %v1385 = vlaneseq
        %v1386 = vshrl.u32 %v1385, 7
        %v1387 = vsub.s32 %v1384, %v1386
        %v1388 = vrot.slane %v1374, %v1387
        %v1389 = vcombine.low %v1217, %v1219
        %v1390 = vcombine.high %v1217, %v1219
        %v1392 = vunpack.c.l.s4 1983009808
        %v1393 = vunpack.c.0.s8 %v1392
        %v1394 = vlaneseq
        %v1395 = vshrl.u32 %v1394, 7
        %v1396 = vsub.s32 %v1393, %v1395
        %v1397 = vrot.slane %v1389, %v1396
        %v1399 = vunpack.c.l.s4 1983009808
        %v1400 = vunpack.c.0.s8 %v1399
        %v1401 = vlaneseq
        %v1402 = vshrl.u32 %v1401, 7
        %v1403 = vsub.s32 %v1400, %v1402
        %v1404 = vrot.slane %v1390, %v1403
        %v1405 = vcombine.low %v1218, %v1220
        %v1406 = vcombine.high %v1218, %v1220
        %v1408 = vunpack.c.l.s4 1983009808
        %v1409 = vunpack.c.0.s8 %v1408
        %v1410 = vlaneseq
        %v1411 = vshrl.u32 %v1410, 7
        %v1412 = vsub.s32 %v1409, %v1411
        %v1413 = vrot.slane %v1405, %v1412
        %v1415 = vunpack.c.l.s4 1983009808
        %v1416 = vunpack.c.0.s8 %v1415
        %v1417 = vlaneseq
        %v1418 = vshrl.u32 %v1417, 7
        %v1419 = vsub.s32 %v1416, %v1418
        %v1420 = vrot.slane %v1406, %v1419
        %v1421 = vcombine.low %v1365, %v1381
        %v1422 = vcombine.high %v1365, %v1381
        %v1424 = vunpack.c.l.s4 1934713408
        %v1425 = vunpack.c.0.s8 %v1424
        %v1426 = vlaneseq
        %v1427 = vshrl.u32 %v1426, 7
        %v1428 = vsub.s32 %v1425, %v1427
        %v1429 = vrot.slane %v1421, %v1428
        %v1431 = vunpack.c.l.s4 1934713408
        %v1432 = vunpack.c.0.s8 %v1431
        %v1433 = vlaneseq
        %v1434 = vshrl.u32 %v1433, 7
        %v1435 = vsub.s32 %v1432, %v1434
        %v1436 = vrot.slane %v1422, %v1435
        %v1437 = vcombine.low %v1372, %v1388
        %v1438 = vcombine.high %v1372, %v1388
        %v1440 = vunpack.c.l.s4 1934713408
        %v1441 = vunpack.c.0.s8 %v1440
        %v1442 = vlaneseq
        %v1443 = vshrl.u32 %v1442, 7
        %v1444 = vsub.s32 %v1441, %v1443
        %v1445 = vrot.slane %v1437, %v1444
        %v1447 = vunpack.c.l.s4 1934713408
        %v1448 = vunpack.c.0.s8 %v1447
        %v1449 = vlaneseq
        %v1450 = vshrl.u32 %v1449, 7
        %v1451 = vsub.s32 %v1448, %v1450
        %v1452 = vrot.slane %v1438, %v1451
        %v1453 = vcombine.low %v1397, %v1413
        %v1454 = vcombine.high %v1397, %v1413
        %v1456 = vunpack.c.l.s4 1934713408
        %v1457 = vunpack.c.0.s8 %v1456
        %v1458 = vlaneseq
        %v1459 = vshrl.u32 %v1458, 7
        %v1460 = vsub.s32 %v1457, %v1459
        %v1461 = vrot.slane %v1453, %v1460
        %v1463 = vunpack.c.l.s4 1934713408
        %v1464 = vunpack.c.0.s8 %v1463
        %v1465 = vlaneseq
        %v1466 = vshrl.u32 %v1465, 7
        %v1467 = vsub.s32 %v1464, %v1466
        %v1468 = vrot.slane %v1454, %v1467
        %v1469 = vcombine.low %v1404, %v1420
        %v1470 = vcombine.high %v1404, %v1420
        %v1472 = vunpack.c.l.s4 1934713408
        %v1473 = vunpack.c.0.s8 %v1472
        %v1474 = vlaneseq
        %v1475 = vshrl.u32 %v1474, 7
        %v1476 = vsub.s32 %v1473, %v1475
        %v1477 = vrot.slane %v1469, %v1476
        %v1479 = vunpack.c.l.s4 1934713408
        %v1480 = vunpack.c.0.s8 %v1479
        %v1481 = vlaneseq
        %v1482 = vshrl.u32 %v1481, 7
        %v1483 = vsub.s32 %v1480, %v1482
        %v1484 = vrot.slane %v1470, %v1483
        %v1485 = vcombine.low %v1429, %v1461
        %v1486 = vcombine.high %v1429, %v1461
        %v1487 = vcombine.low %v1436, %v1468
        %v1488 = vcombine.high %v1436, %v1468
        %v1489 = vcombine.low %v1445, %v1477
        %v1490 = vcombine.high %v1445, %v1477
        %v1491 = vcombine.low %v1452, %v1484
        %v1492 = vcombine.high %v1452, %v1484
        %v1493 = vadd.f32 %v901, %v1349
        %v1494 = vadd.f32 %v902, %v1485
        %v1495 = vadd.f32 %v903, %v1350
        %v1496 = vadd.f32 %v904, %v1486
        %v1497 = vadd.f32 %v905, %v1351
        %v1498 = vadd.f32 %v906, %v1487
        %v1499 = vadd.f32 %v907, %v1352
        %v1500 = vadd.f32 %v908, %v1488
        %v1501 = vadd.f32 %v909, %v1353
        %v1502 = vadd.f32 %v910, %v1489
        %v1503 = vadd.f32 %v911, %v1354
        %v1504 = vadd.f32 %v912, %v1490
        %v1505 = vadd.f32 %v913, %v1355
        %v1506 = vadd.f32 %v914, %v1491
        %v1507 = vadd.f32 %v915, %v1356
        %v1508 = vadd.f32 %v916, %v1492
        %v1509 = vmul.f32 %v1493, 0.5
        %v1510 = vmul.f32 %v1494, 0.5
        %v1511 = vmul.f32 %v1495, 0.5
        %v1512 = vmul.f32 %v1496, 0.5
        %v1513 = vmul.f32 %v1497, 0.5
        %v1514 = vmul.f32 %v1498, 0.5
        %v1515 = vmul.f32 %v1499, 0.5
        %v1516 = vmul.f32 %v1500, 0.5
        %v1517 = vmul.f32 %v1501, 0.5
        %v1518 = vmul.f32 %v1502, 0.5
        %v1519 = vmul.f32 %v1503, 0.5
        %v1520 = vmul.f32 %v1504, 0.5
        %v1521 = vmul.f32 %v1505, 0.5
        %v1522 = vmul.f32 %v1506, 0.5
        %v1523 = vmul.f32 %v1507, 0.5
        %v1524 = vmul.f32 %v1508, 0.5
        %v1525 = vld [vmem:[%s4] sm:$0xff]
        %v1526 = vld [vmem:[%s4 + $0x8] sm:$0xff]
        %v1527 = vld [vmem:[%s4 + $0x10] sm:$0xff]
        %v1528 = vld [vmem:[%s4 + $0x18] sm:$0xff]
        %v1529 = vld [vmem:[%s4 + $0x20] sm:$0x1f]
        %v1530 = vld [vmem:[%s5] sm:$0xff]
        %v1531 = vld [vmem:[%s5 + $0x8] sm:$0xff]
        %v1532 = vld [vmem:[%s5 + $0x10] sm:$0xff]
        %v1533 = vld [vmem:[%s5 + $0x18] sm:$0xff]
        %v1534 = vld [vmem:[%s5 + $0x20] sm:$0x1f]
        %1536 = vset.pattern.permute.xlu0 0
        %1537 = vperm.xlu0 %1536, %v1530
        %v1538 = vpop.permute.xlu0 %1537
        %1541 = vset.pattern.permute.xlu0 0
        %1542 = vperm.xlu0 %1541, %v1531
        %v1543 = vpop.permute.xlu0 %1542
        %1546 = vset.pattern.permute.xlu0 0
        %1547 = vperm.xlu0 %1546, %v1532
        %v1548 = vpop.permute.xlu0 %1547
        %1551 = vset.pattern.permute.xlu0 0
        %1552 = vperm.xlu0 %1551, %v1533
        %v1553 = vpop.permute.xlu0 %1552
        %1556 = vset.pattern.permute.xlu0 0
        %1557 = vperm.xlu0 %1556, %v1534
        %v1558 = vpop.permute.xlu0 %1557
        %v1561 = vsel %vm615, %v1525, 0
        %v1564 = vsel %vm615, %v1526, 0
        %v1567 = vsel %vm615, %v1527, 0
        %v1570 = vsel %vm615, %v1528, 0
        %v1573 = vsel %vm615, %v1529, 0
        %v1576 = vsel %vm615, %v901, 0
        %v1579 = vsel %vm615, %v902, 0
        %v1582 = vsel %vm615, %v903, 0
        %v1585 = vsel %vm615, %v904, 0
        %v1588 = vsel %vm615, %v905, 0
        %v1591 = vsel %vm615, %v906, 0
        %v1594 = vsel %vm615, %v907, 0
        %v1597 = vsel %vm615, %v908, 0
        %v1600 = vsel %vm615, %v909, 0
        %v1603 = vsel %vm615, %v910, 0
        %v1606 = vsel %vm615, %v911, 0
        %v1609 = vsel %vm615, %v912, 0
        %v1612 = vsel %vm615, %v913, 0
        %v1615 = vsel %vm615, %v914, 0
        %v1618 = vsel %vm615, %v915, 0
        %v1621 = vsel %vm615, %v916, 0
        %1623 = vmatprep.subr.mxu0 0.0
        %1624 = vmatpush1.xpose.msra.mxu0 %v1576
        %1625 = vmatprep.subr.mxu0 0.0
        %1626 = vmatpush1.xpose.msra.mxu0 %v1579
        %1627 = vmatprep.subr.mxu0 0.0
        %1628 = vmatpush1.xpose.msra.mxu0 %v1582
        %1629 = vmatprep.subr.mxu0 0.0
        %1630 = vmatpush1.xpose.msra.mxu0 %v1585
        %1631 = vmatprep.subr.mxu0 0.0
        %1632 = vmatpush1.xpose.msra.mxu0 %v1588
        %1633 = vmatprep.subr.mxu0 0.0
        %1634 = vmatpush1.xpose.msra.mxu0 %v1591
        %1635 = vmatprep.subr.mxu0 0.0
        %1636 = vmatpush1.xpose.msra.mxu0 %v1594
        %1637 = vmatprep.subr.mxu0 0.0
        %1638 = vmatpush1.xpose.msra.mxu0 %v1597
        %1639 = vmatprep.subr.mxu0 0.0
        %1640 = vmatpush1.xpose.msra.mxu0 %v1600
        %1641 = vmatprep.subr.mxu0 0.0
        %1642 = vmatpush1.xpose.msra.mxu0 %v1603
        %1643 = vmatprep.subr.mxu0 0.0
        %1644 = vmatpush1.xpose.msra.mxu0 %v1606
        %1645 = vmatprep.subr.mxu0 0.0
        %1646 = vmatpush1.xpose.msra.mxu0 %v1609
        %1647 = vmatprep.subr.mxu0 0.0
        %1648 = vmatpush1.xpose.msra.mxu0 %v1612
        %1649 = vmatprep.subr.mxu0 0.0
        %1650 = vmatpush1.xpose.msra.mxu0 %v1615
        %1651 = vmatprep.subr.mxu0 0.0
        %1652 = vmatpush1.xpose.msra.mxu0 %v1618
        %1653 = vmatprep.subr.mxu0 0.0
        %1654 = vmatpush1.xpose.msra.mxu0 %v1621
        %1655 = vmatprep.subr.mxu0 0.0
        %1656 = vmatpush1.xpose.msra.mxu0 0.0
        %1657 = vmatprep.subr.mxu0 0.0
        %1658 = vmatpush1.xpose.msra.mxu0 0.0
        %1659 = vmatprep.subr.mxu0 0.0
        %1660 = vmatpush1.xpose.msra.mxu0 0.0
        %1661 = vmatprep.subr.mxu0 0.0
        %1662 = vmatpush1.xpose.msra.mxu0 0.0
        %1663 = vmatprep.subr.mxu0 0.0
        %1664 = vmatpush1.xpose.msra.mxu0 0.0
        %1665 = vmatprep.subr.mxu0 0.0
        %1666 = vmatpush1.xpose.msra.mxu0 0.0
        %1667 = vmatprep.subr.mxu0 0.0
        %1668 = vmatpush1.xpose.msra.mxu0 0.0
        %1669 = vmatprep.subr.mxu0 0.0
        %1670 = vmatpush1.xpose.msra.mxu0 0.0
        %1671 = vmatprep.subr.mxu0 0.0
        %1672 = vmatpush1.xpose.msra.mxu0 0.0
        %1673 = vmatprep.subr.mxu0 0.0
        %1674 = vmatpush1.xpose.msra.mxu0 0.0
        %1675 = vmatprep.subr.mxu0 0.0
        %1676 = vmatpush1.xpose.msra.mxu0 0.0
        %1677 = vmatprep.subr.mxu0 0.0
        %1678 = vmatpush1.xpose.msra.mxu0 0.0
        %1679 = vmatprep.subr.mxu0 0.0
        %1680 = vmatpush1.xpose.msra.mxu0 0.0
        %1681 = vmatprep.subr.mxu0 0.0
        %1682 = vmatpush1.xpose.msra.mxu0 0.0
        %1683 = vmatprep.subr.mxu0 0.0
        %1684 = vmatpush1.xpose.msra.mxu0 0.0
        %1685 = vmatprep.subr.mxu0 0.0
        %1686 = vmatpush1.xpose.msra.mxu0 0.0
        %1687 = vmatprep.mubr.f32.mxu0 0.0
        %1688 = vmatmul.mubr.f32.gmra.mrb[0].mxu0 %v1561
        %v1689 = vpop.f32.mrb[0].mxu0
        %v1690 = vadd.f32 %v1538, %v1689
        %v1691 = vpop.f32.mrb[0].mxu0
        %1692 = vmatprep.mubr.f32.mxu0 0.0
        %1693 = vmatmul.mubr.f32.gmra.mrb[0].mxu0 %v1564
        %v1694 = vpop.f32.mrb[0].mxu0
        %v1695 = vadd.f32 %v1543, %v1694
        %v1696 = vpop.f32.mrb[0].mxu0
        %1697 = vmatprep.mubr.f32.mxu0 0.0
        %1698 = vmatmul.mubr.f32.gmra.mrb[0].mxu0 %v1567
        %v1699 = vpop.f32.mrb[0].mxu0
        %v1700 = vadd.f32 %v1548, %v1699
        %v1701 = vpop.f32.mrb[0].mxu0
        %1702 = vmatprep.mubr.f32.mxu0 0.0
        %1703 = vmatmul.mubr.f32.gmra.mrb[0].mxu0 %v1570
        %v1704 = vpop.f32.mrb[0].mxu0
        %v1705 = vadd.f32 %v1553, %v1704
        %v1706 = vpop.f32.mrb[0].mxu0
        %1707 = vmatprep.mubr.f32.mxu0 0.0
        %1708 = vmatmul.mubr.f32.gmra.mrb[0].mxu0 %v1573
        %v1709 = vpop.f32.mrb[0].mxu0
        %v1710 = vadd.f32 %v1558, %v1709
        %v1711 = vpop.f32.mrb[0].mxu0
        %1712 = vdwg.mxu0
        %1713 = vst [vmem:[%s577] sm:$0xff] %v1690
        %1714 = vst [vmem:[%s577 + $0x8] sm:$0xff] %v1695
        %1715 = vst [vmem:[%s577 + $0x10] sm:$0xff] %v1700
        %1716 = vst [vmem:[%s577 + $0x18] sm:$0xff] %v1705
        %1717 = vst [vmem:[%s577 + $0x20] sm:$0x1f] %v1710
        %v1718 = vld [vmem:[%s6] sm:$0xff]
        %v1719 = vld [vmem:[%s6 + $0x8] sm:$0xff]
        %v1720 = vld [vmem:[%s6 + $0x10] sm:$0x7]
        %v1721 = vld [vmem:[%s7] sm:$0xff]
        %v1722 = vld [vmem:[%s7 + $0x8] sm:$0xff]
        %v1723 = vld [vmem:[%s7 + $0x10] sm:$0x7]
        %1725 = vset.pattern.permute.xlu0 0
        %1726 = vperm.xlu0 %1725, %v1721
        %v1727 = vpop.permute.xlu0 %1726
        %1730 = vset.pattern.permute.xlu0 0
        %1731 = vperm.xlu0 %1730, %v1722
        %v1732 = vpop.permute.xlu0 %1731
        %1735 = vset.pattern.permute.xlu0 0
        %1736 = vperm.xlu0 %1735, %v1723
        %v1737 = vpop.permute.xlu0 %1736
        %v1740 = vsel %vm615, %v1718, 0
        %v1743 = vsel %vm615, %v1719, 0
        %v1746 = vsel %vm615, %v1720, 0
        %1748 = vmatprep.subr.mxu0 0.0
        %1749 = vmatpush1.xpose.msra.mxu0 %v1576
        %1750 = vmatprep.subr.mxu0 0.0
        %1751 = vmatpush1.xpose.msra.mxu0 %v1579
        %1752 = vmatprep.subr.mxu0 0.0
        %1753 = vmatpush1.xpose.msra.mxu0 %v1582
        %1754 = vmatprep.subr.mxu0 0.0
        %1755 = vmatpush1.xpose.msra.mxu0 %v1585
        %1756 = vmatprep.subr.mxu0 0.0
        %1757 = vmatpush1.xpose.msra.mxu0 %v1588
        %1758 = vmatprep.subr.mxu0 0.0
        %1759 = vmatpush1.xpose.msra.mxu0 %v1591
        %1760 = vmatprep.subr.mxu0 0.0
        %1761 = vmatpush1.xpose.msra.mxu0 %v1594
        %1762 = vmatprep.subr.mxu0 0.0
        %1763 = vmatpush1.xpose.msra.mxu0 %v1597
        %1764 = vmatprep.subr.mxu0 0.0
        %1765 = vmatpush1.xpose.msra.mxu0 %v1600
        %1766 = vmatprep.subr.mxu0 0.0
        %1767 = vmatpush1.xpose.msra.mxu0 %v1603
        %1768 = vmatprep.subr.mxu0 0.0
        %1769 = vmatpush1.xpose.msra.mxu0 %v1606
        %1770 = vmatprep.subr.mxu0 0.0
        %1771 = vmatpush1.xpose.msra.mxu0 %v1609
        %1772 = vmatprep.subr.mxu0 0.0
        %1773 = vmatpush1.xpose.msra.mxu0 %v1612
        %1774 = vmatprep.subr.mxu0 0.0
        %1775 = vmatpush1.xpose.msra.mxu0 %v1615
        %1776 = vmatprep.subr.mxu0 0.0
        %1777 = vmatpush1.xpose.msra.mxu0 %v1618
        %1778 = vmatprep.subr.mxu0 0.0
        %1779 = vmatpush1.xpose.msra.mxu0 %v1621
        %1780 = vmatprep.subr.mxu0 0.0
        %1781 = vmatpush1.xpose.msra.mxu0 0.0
        %1782 = vmatprep.subr.mxu0 0.0
        %1783 = vmatpush1.xpose.msra.mxu0 0.0
        %1784 = vmatprep.subr.mxu0 0.0
        %1785 = vmatpush1.xpose.msra.mxu0 0.0
        %1786 = vmatprep.subr.mxu0 0.0
        %1787 = vmatpush1.xpose.msra.mxu0 0.0
        %1788 = vmatprep.subr.mxu0 0.0
        %1789 = vmatpush1.xpose.msra.mxu0 0.0
        %1790 = vmatprep.subr.mxu0 0.0
        %1791 = vmatpush1.xpose.msra.mxu0 0.0
        %1792 = vmatprep.subr.mxu0 0.0
        %1793 = vmatpush1.xpose.msra.mxu0 0.0
        %1794 = vmatprep.subr.mxu0 0.0
        %1795 = vmatpush1.xpose.msra.mxu0 0.0
        %1796 = vmatprep.subr.mxu0 0.0
        %1797 = vmatpush1.xpose.msra.mxu0 0.0
        %1798 = vmatprep.subr.mxu0 0.0
        %1799 = vmatpush1.xpose.msra.mxu0 0.0
        %1800 = vmatprep.subr.mxu0 0.0
        %1801 = vmatpush1.xpose.msra.mxu0 0.0
        %1802 = vmatprep.subr.mxu0 0.0
        %1803 = vmatpush1.xpose.msra.mxu0 0.0
        %1804 = vmatprep.subr.mxu0 0.0
        %1805 = vmatpush1.xpose.msra.mxu0 0.0
        %1806 = vmatprep.subr.mxu0 0.0
        %1807 = vmatpush1.xpose.msra.mxu0 0.0
        %1808 = vmatprep.subr.mxu0 0.0
        %1809 = vmatpush1.xpose.msra.mxu0 0.0
        %1810 = vmatprep.subr.mxu0 0.0
        %1811 = vmatpush1.xpose.msra.mxu0 0.0
        %1812 = vmatprep.mubr.f32.mxu0 0.0
        %1813 = vmatmul.mubr.f32.gmra.mrb[0].mxu0 %v1740
        %v1814 = vpop.f32.mrb[0].mxu0
        %v1815 = vadd.f32 %v1727, %v1814
        %v1816 = vpop.f32.mrb[0].mxu0
        %1817 = vmatprep.mubr.f32.mxu0 0.0
        %1818 = vmatmul.mubr.f32.gmra.mrb[0].mxu0 %v1743
        %v1819 = vpop.f32.mrb[0].mxu0
        %v1820 = vadd.f32 %v1732, %v1819
        %v1821 = vpop.f32.mrb[0].mxu0
        %1822 = vmatprep.mubr.f32.mxu0 0.0
        %1823 = vmatmul.mubr.f32.gmra.mrb[0].mxu0 %v1746
        %v1824 = vpop.f32.mrb[0].mxu0
        %v1825 = vadd.f32 %v1737, %v1824
        %v1826 = vpop.f32.mrb[0].mxu0
        %1827 = vdwg.mxu0
        %1828 = vst [vmem:[%s583] sm:$0xff] %v1815
        %1829 = vst [vmem:[%s583 + $0x8] sm:$0xff] %v1820
        %1830 = vst [vmem:[%s583 + $0x10] sm:$0x7] %v1825
        %v1831 = vld [vmem:[%s8] sm:$0xff]
        %v1832 = vld [vmem:[%s8 + $0x8] sm:$0xff]
        %v1833 = vld [vmem:[%s8 + $0x10] sm:$0xff]
        %v1834 = vld [vmem:[%s8 + $0x18] sm:$0xff]
        %v1835 = vld [vmem:[%s8 + $0x20] sm:$0x1f]
        %v1836 = vld [vmem:[%s9] sm:$0xff]
        %v1837 = vld [vmem:[%s9 + $0x8] sm:$0xff]
        %v1838 = vld [vmem:[%s9 + $0x10] sm:$0xff]
        %v1839 = vld [vmem:[%s9 + $0x18] sm:$0xff]
        %v1840 = vld [vmem:[%s9 + $0x20] sm:$0x1f]
        %1842 = vset.pattern.permute.xlu0 0
        %1843 = vperm.xlu0 %1842, %v1836
        %v1844 = vpop.permute.xlu0 %1843
        %1847 = vset.pattern.permute.xlu0 0
        %1848 = vperm.xlu0 %1847, %v1837
        %v1849 = vpop.permute.xlu0 %1848
        %1852 = vset.pattern.permute.xlu0 0
        %1853 = vperm.xlu0 %1852, %v1838
        %v1854 = vpop.permute.xlu0 %1853
        %1857 = vset.pattern.permute.xlu0 0
        %1858 = vperm.xlu0 %1857, %v1839
        %v1859 = vpop.permute.xlu0 %1858
        %1862 = vset.pattern.permute.xlu0 0
        %1863 = vperm.xlu0 %1862, %v1840
        %v1864 = vpop.permute.xlu0 %1863
        %v1867 = vsel %vm615, %v1831, 0
        %v1870 = vsel %vm615, %v1832, 0
        %v1873 = vsel %vm615, %v1833, 0
        %v1876 = vsel %vm615, %v1834, 0
        %v1879 = vsel %vm615, %v1835, 0
        %v1882 = vsel %vm615, %v1509, 0
        %v1885 = vsel %vm615, %v1510, 0
        %v1888 = vsel %vm615, %v1511, 0
        %v1891 = vsel %vm615, %v1512, 0
        %v1894 = vsel %vm615, %v1513, 0
        %v1897 = vsel %vm615, %v1514, 0
        %v1900 = vsel %vm615, %v1515, 0
        %v1903 = vsel %vm615, %v1516, 0
        %v1906 = vsel %vm615, %v1517, 0
        %v1909 = vsel %vm615, %v1518, 0
        %v1912 = vsel %vm615, %v1519, 0
        %v1915 = vsel %vm615, %v1520, 0
        %v1918 = vsel %vm615, %v1521, 0
        %v1921 = vsel %vm615, %v1522, 0
        %v1924 = vsel %vm615, %v1523, 0
        %v1927 = vsel %vm615, %v1524, 0
        %1929 = vmatprep.subr.mxu0 0.0
        %1930 = vmatpush1.xpose.msra.mxu0 %v1882
        %1931 = vmatprep.subr.mxu0 0.0
        %1932 = vmatpush1.xpose.msra.mxu0 %v1885
        %1933 = vmatprep.subr.mxu0 0.0
        %1934 = vmatpush1.xpose.msra.mxu0 %v1888
        %1935 = vmatprep.subr.mxu0 0.0
        %1936 = vmatpush1.xpose.msra.mxu0 %v1891
        %1937 = vmatprep.subr.mxu0 0.0
        %1938 = vmatpush1.xpose.msra.mxu0 %v1894
        %1939 = vmatprep.subr.mxu0 0.0
        %1940 = vmatpush1.xpose.msra.mxu0 %v1897
        %1941 = vmatprep.subr.mxu0 0.0
        %1942 = vmatpush1.xpose.msra.mxu0 %v1900
        %1943 = vmatprep.subr.mxu0 0.0
        %1944 = vmatpush1.xpose.msra.mxu0 %v1903
        %1945 = vmatprep.subr.mxu0 0.0
        %1946 = vmatpush1.xpose.msra.mxu0 %v1906
        %1947 = vmatprep.subr.mxu0 0.0
        %1948 = vmatpush1.xpose.msra.mxu0 %v1909
        %1949 = vmatprep.subr.mxu0 0.0
        %1950 = vmatpush1.xpose.msra.mxu0 %v1912
        %1951 = vmatprep.subr.mxu0 0.0
        %1952 = vmatpush1.xpose.msra.mxu0 %v1915
        %1953 = vmatprep.subr.mxu0 0.0
        %1954 = vmatpush1.xpose.msra.mxu0 %v1918
        %1955 = vmatprep.subr.mxu0 0.0
        %1956 = vmatpush1.xpose.msra.mxu0 %v1921
        %1957 = vmatprep.subr.mxu0 0.0
        %1958 = vmatpush1.xpose.msra.mxu0 %v1924
        %1959 = vmatprep.subr.mxu0 0.0
        %1960 = vmatpush1.xpose.msra.mxu0 %v1927
        %1961 = vmatprep.subr.mxu0 0.0
        %1962 = vmatpush1.xpose.msra.mxu0 0.0
        %1963 = vmatprep.subr.mxu0 0.0
        %1964 = vmatpush1.xpose.msra.mxu0 0.0
        %1965 = vmatprep.subr.mxu0 0.0
        %1966 = vmatpush1.xpose.msra.mxu0 0.0
        %1967 = vmatprep.subr.mxu0 0.0
        %1968 = vmatpush1.xpose.msra.mxu0 0.0
        %1969 = vmatprep.subr.mxu0 0.0
        %1970 = vmatpush1.xpose.msra.mxu0 0.0
        %1971 = vmatprep.subr.mxu0 0.0
        %1972 = vmatpush1.xpose.msra.mxu0 0.0
        %1973 = vmatprep.subr.mxu0 0.0
        %1974 = vmatpush1.xpose.msra.mxu0 0.0
        %1975 = vmatprep.subr.mxu0 0.0
        %1976 = vmatpush1.xpose.msra.mxu0 0.0
        %1977 = vmatprep.subr.mxu0 0.0
        %1978 = vmatpush1.xpose.msra.mxu0 0.0
        %1979 = vmatprep.subr.mxu0 0.0
        %1980 = vmatpush1.xpose.msra.mxu0 0.0
        %1981 = vmatprep.subr.mxu0 0.0
        %1982 = vmatpush1.xpose.msra.mxu0 0.0
        %1983 = vmatprep.subr.mxu0 0.0
        %1984 = vmatpush1.xpose.msra.mxu0 0.0
        %1985 = vmatprep.subr.mxu0 0.0
        %1986 = vmatpush1.xpose.msra.mxu0 0.0
        %1987 = vmatprep.subr.mxu0 0.0
        %1988 = vmatpush1.xpose.msra.mxu0 0.0
        %1989 = vmatprep.subr.mxu0 0.0
        %1990 = vmatpush1.xpose.msra.mxu0 0.0
        %1991 = vmatprep.subr.mxu0 0.0
        %1992 = vmatpush1.xpose.msra.mxu0 0.0
        %1993 = vmatprep.mubr.f32.mxu0 0.0
        %1994 = vmatmul.mubr.f32.gmra.mrb[0].mxu0 %v1867
        %v1995 = vpop.f32.mrb[0].mxu0
        %v1996 = vadd.f32 %v1844, %v1995
        %v1997 = vpop.f32.mrb[0].mxu0
        %1998 = vmatprep.mubr.f32.mxu0 0.0
        %1999 = vmatmul.mubr.f32.gmra.mrb[0].mxu0 %v1870
        %v2000 = vpop.f32.mrb[0].mxu0
        %v2001 = vadd.f32 %v1849, %v2000
        %v2002 = vpop.f32.mrb[0].mxu0
        %2003 = vmatprep.mubr.f32.mxu0 0.0
        %2004 = vmatmul.mubr.f32.gmra.mrb[0].mxu0 %v1873
        %v2005 = vpop.f32.mrb[0].mxu0
        %v2006 = vadd.f32 %v1854, %v2005
        %v2007 = vpop.f32.mrb[0].mxu0
        %2008 = vmatprep.mubr.f32.mxu0 0.0
        %2009 = vmatmul.mubr.f32.gmra.mrb[0].mxu0 %v1876
        %v2010 = vpop.f32.mrb[0].mxu0
        %v2011 = vadd.f32 %v1859, %v2010
        %v2012 = vpop.f32.mrb[0].mxu0
        %2013 = vmatprep.mubr.f32.mxu0 0.0
        %2014 = vmatmul.mubr.f32.gmra.mrb[0].mxu0 %v1879
        %v2015 = vpop.f32.mrb[0].mxu0
        %v2016 = vadd.f32 %v1864, %v2015
        %v2017 = vpop.f32.mrb[0].mxu0
        %2018 = vdwg.mxu0
        %2019 = vst [vmem:[%s589] sm:$0xff] %v1996
        %2020 = vst [vmem:[%s589 + $0x8] sm:$0xff] %v2001
        %2021 = vst [vmem:[%s589 + $0x10] sm:$0xff] %v2006
        %2022 = vst [vmem:[%s589 + $0x18] sm:$0xff] %v2011
        %2023 = vst [vmem:[%s589 + $0x20] sm:$0x1f] %v2016
        %v2024 = vld [vmem:[%s10] sm:$0xff]
        %v2025 = vld [vmem:[%s10 + $0x8] sm:$0xff]
        %v2026 = vld [vmem:[%s10 + $0x10] sm:$0xff]
        %v2027 = vld [vmem:[%s10 + $0x18] sm:$0xff]
        %v2028 = vld [vmem:[%s10 + $0x20] sm:$0x1f]
        %v2029 = vld [vmem:[%s11] sm:$0xff]
        %v2030 = vld [vmem:[%s11 + $0x8] sm:$0xff]
        %v2031 = vld [vmem:[%s11 + $0x10] sm:$0xff]
        %v2032 = vld [vmem:[%s11 + $0x18] sm:$0xff]
        %v2033 = vld [vmem:[%s11 + $0x20] sm:$0x1f]
        %2035 = vset.pattern.permute.xlu0 0
        %2036 = vperm.xlu0 %2035, %v2029
        %v2037 = vpop.permute.xlu0 %2036
        %2040 = vset.pattern.permute.xlu0 0
        %2041 = vperm.xlu0 %2040, %v2030
        %v2042 = vpop.permute.xlu0 %2041
        %2045 = vset.pattern.permute.xlu0 0
        %2046 = vperm.xlu0 %2045, %v2031
        %v2047 = vpop.permute.xlu0 %2046
        %2050 = vset.pattern.permute.xlu0 0
        %2051 = vperm.xlu0 %2050, %v2032
        %v2052 = vpop.permute.xlu0 %2051
        %2055 = vset.pattern.permute.xlu0 0
        %2056 = vperm.xlu0 %2055, %v2033
        %v2057 = vpop.permute.xlu0 %2056
        %v2060 = vsel %vm615, %v2024, 0
        %v2063 = vsel %vm615, %v2025, 0
        %v2066 = vsel %vm615, %v2026, 0
        %v2069 = vsel %vm615, %v2027, 0
        %v2072 = vsel %vm615, %v2028, 0
        %2074 = vmatprep.subr.mxu0 0.0
        %2075 = vmatpush1.xpose.msra.mxu0 %v1882
        %2076 = vmatprep.subr.mxu0 0.0
        %2077 = vmatpush1.xpose.msra.mxu0 %v1885
        %2078 = vmatprep.subr.mxu0 0.0
        %2079 = vmatpush1.xpose.msra.mxu0 %v1888
        %2080 = vmatprep.subr.mxu0 0.0
        %2081 = vmatpush1.xpose.msra.mxu0 %v1891
        %2082 = vmatprep.subr.mxu0 0.0
        %2083 = vmatpush1.xpose.msra.mxu0 %v1894
        %2084 = vmatprep.subr.mxu0 0.0
        %2085 = vmatpush1.xpose.msra.mxu0 %v1897
        %2086 = vmatprep.subr.mxu0 0.0
        %2087 = vmatpush1.xpose.msra.mxu0 %v1900
        %2088 = vmatprep.subr.mxu0 0.0
        %2089 = vmatpush1.xpose.msra.mxu0 %v1903
        %2090 = vmatprep.subr.mxu0 0.0
        %2091 = vmatpush1.xpose.msra.mxu0 %v1906
        %2092 = vmatprep.subr.mxu0 0.0
        %2093 = vmatpush1.xpose.msra.mxu0 %v1909
        %2094 = vmatprep.subr.mxu0 0.0
        %2095 = vmatpush1.xpose.msra.mxu0 %v1912
        %2096 = vmatprep.subr.mxu0 0.0
        %2097 = vmatpush1.xpose.msra.mxu0 %v1915
        %2098 = vmatprep.subr.mxu0 0.0
        %2099 = vmatpush1.xpose.msra.mxu0 %v1918
        %2100 = vmatprep.subr.mxu0 0.0
        %2101 = vmatpush1.xpose.msra.mxu0 %v1921
        %2102 = vmatprep.subr.mxu0 0.0
        %2103 = vmatpush1.xpose.msra.mxu0 %v1924
        %2104 = vmatprep.subr.mxu0 0.0
        %2105 = vmatpush1.xpose.msra.mxu0 %v1927
        %2106 = vmatprep.subr.mxu0 0.0
        %2107 = vmatpush1.xpose.msra.mxu0 0.0
        %2108 = vmatprep.subr.mxu0 0.0
        %2109 = vmatpush1.xpose.msra.mxu0 0.0
        %2110 = vmatprep.subr.mxu0 0.0
        %2111 = vmatpush1.xpose.msra.mxu0 0.0
        %2112 = vmatprep.subr.mxu0 0.0
        %2113 = vmatpush1.xpose.msra.mxu0 0.0
        %2114 = vmatprep.subr.mxu0 0.0
        %2115 = vmatpush1.xpose.msra.mxu0 0.0
        %2116 = vmatprep.subr.mxu0 0.0
        %2117 = vmatpush1.xpose.msra.mxu0 0.0
        %2118 = vmatprep.subr.mxu0 0.0
        %2119 = vmatpush1.xpose.msra.mxu0 0.0
        %2120 = vmatprep.subr.mxu0 0.0
        %2121 = vmatpush1.xpose.msra.mxu0 0.0
        %2122 = vmatprep.subr.mxu0 0.0
        %2123 = vmatpush1.xpose.msra.mxu0 0.0
        %2124 = vmatprep.subr.mxu0 0.0
        %2125 = vmatpush1.xpose.msra.mxu0 0.0
        %2126 = vmatprep.subr.mxu0 0.0
        %2127 = vmatpush1.xpose.msra.mxu0 0.0
        %2128 = vmatprep.subr.mxu0 0.0
        %2129 = vmatpush1.xpose.msra.mxu0 0.0
        %2130 = vmatprep.subr.mxu0 0.0
        %2131 = vmatpush1.xpose.msra.mxu0 0.0
        %2132 = vmatprep.subr.mxu0 0.0
        %2133 = vmatpush1.xpose.msra.mxu0 0.0
        %2134 = vmatprep.subr.mxu0 0.0
        %2135 = vmatpush1.xpose.msra.mxu0 0.0
        %2136 = vmatprep.subr.mxu0 0.0
        %2137 = vmatpush1.xpose.msra.mxu0 0.0
        %2138 = vmatprep.mubr.f32.mxu0 0.0
        %2139 = vmatmul.mubr.f32.gmra.mrb[0].mxu0 %v2060
        %v2140 = vpop.f32.mrb[0].mxu0
        %v2141 = vadd.f32 %v2037, %v2140
        %v2142 = vpop.f32.mrb[0].mxu0
        %2143 = vmatprep.mubr.f32.mxu0 0.0
        %2144 = vmatmul.mubr.f32.gmra.mrb[0].mxu0 %v2063
        %v2145 = vpop.f32.mrb[0].mxu0
        %v2146 = vadd.f32 %v2042, %v2145
        %v2147 = vpop.f32.mrb[0].mxu0
        %2148 = vmatprep.mubr.f32.mxu0 0.0
        %2149 = vmatmul.mubr.f32.gmra.mrb[0].mxu0 %v2066
        %v2150 = vpop.f32.mrb[0].mxu0
        %v2151 = vadd.f32 %v2047, %v2150
        %v2152 = vpop.f32.mrb[0].mxu0
        %2153 = vmatprep.mubr.f32.mxu0 0.0
        %2154 = vmatmul.mubr.f32.gmra.mrb[0].mxu0 %v2069
        %v2155 = vpop.f32.mrb[0].mxu0
        %v2156 = vadd.f32 %v2052, %v2155
        %v2157 = vpop.f32.mrb[0].mxu0
        %2158 = vmatprep.mubr.f32.mxu0 0.0
        %2159 = vmatmul.mubr.f32.gmra.mrb[0].mxu0 %v2072
        %v2160 = vpop.f32.mrb[0].mxu0
        %v2161 = vadd.f32 %v2057, %v2160
        %v2162 = vpop.f32.mrb[0].mxu0
        %2163 = vdwg.mxu0
        %2164 = vst [vmem:[%s595] sm:$0xff] %v2141
        %2165 = vst [vmem:[%s595 + $0x8] sm:$0xff] %v2146
        %2166 = vst [vmem:[%s595 + $0x10] sm:$0xff] %v2151
        %2167 = vst [vmem:[%s595 + $0x18] sm:$0xff] %v2156
        %2168 = vst [vmem:[%s595 + $0x20] sm:$0x1f] %v2161
        %s2169 = sand.u32 %s321, 1
        %s2170 = sand.u32 %s321, 1
        %s2171 = smul.addr %s2170, 40
        %s2172 = scalar_lea.vmem [#allocation6], %s2171
        %s2173 = sand.u32 %s349, 1
        %s2174 = sand.u32 %s349, 1
        %s2175 = smul.addr %s2174, 24
        %s2176 = scalar_lea.vmem [#allocation7], %s2175
        %s2177 = sand.u32 %s377, 1
        %s2178 = sand.u32 %s377, 1
        %s2179 = smul.addr %s2178, 40
        %s2180 = scalar_lea.vmem [#allocation8], %s2179
        %s2181 = sand.u32 %s405, 1
        %s2182 = sand.u32 %s405, 1
        %s2183 = smul.addr %s2182, 40
        %s2184 = scalar_lea.vmem [#allocation9], %s2183
        // Predicated region
        $region77: #{tpu_custom_call.1} parent=67 // pred_check
          %p2185 = pneg %p331
        $region78: #{tpu_custom_call.1} parent=67 // pred_check_branch
          %2187 = sbr.rel (%p2185) target = $region80
        $region79: #{tpu_custom_call.1} parent=67 // pred_region
          %s2188 = smul.addr %s37, 10
          %s2189 = sadd.s32 %s38, %s2188
          %s2190 = smul.addr %s2189, 8
          %s2191 = scalar_lea.vmem %s12, %s2190
          // Predicated region
          $region81: #{tpu_custom_call.1} parent=79 // pred_check
            _
          $region82: #{tpu_custom_call.1} parent=79 // pred_check_branch
            %2193 = sbr.rel (0) target = $region84
          $region83: #{tpu_custom_call.1} parent=79 // pred_region
            // Predicated region
            $region85: #{tpu_custom_call.1} parent=83 // pred_check
              _
            $region86: #{tpu_custom_call.1} parent=83 // pred_check_branch
              %2195 = sbr.rel (0) target = $region88
            $region87: #{tpu_custom_call.1} parent=83 // pred_region
              // Predicated region
              $region100: #{tpu_custom_call.1} parent=87 // pred_check
                _
              $region101: #{tpu_custom_call.1} parent=87 // pred_check_branch
                %2218 = sbr.rel (0) target = $region103
              $region102: #{tpu_custom_call.1} parent=87 // pred_region
                loop: start=0, step=1, limit=1
                $region104: #{tpu_custom_call.1} parent=102 // loop_pre_header
                  _
                $region105: #{tpu_custom_call.1} parent=102 // loop_header
                  %s2220 = sphi 0, %s2224
                  %p2221 = scmp.ge.s32.totalorder %s2220, 1
                  %s2225 = sphi %s2172, %s2172
                  %s2226 = sphi %s2191, %s2191
                $region106: #{tpu_custom_call.1} parent=102 // loop_header_branch
                  %2223 = sbr.rel (%p2221) target = $region110
                $region107: #{tpu_custom_call.1} parent=102 // loop_body
                  %v2227 = vld [vmem:[%s2225] sm:$0xff]
                  %2228 = vst [vmem:[%s2226] sm:$0xff] %v2227
                  %v2229 = vld [vmem:[%s2225 + $0x8] sm:$0xff]
                  %2230 = vst [vmem:[%s2226 + $0x10] sm:$0xff] %v2229
                  %v2231 = vld [vmem:[%s2225 + $0x10] sm:$0xff]
                  %2232 = vst [vmem:[%s2226 + $0x20] sm:$0xff] %v2231
                  %v2233 = vld [vmem:[%s2225 + $0x18] sm:$0xff]
                  %2234 = vst [vmem:[%s2226 + $0x30] sm:$0xff] %v2233
                  %v2235 = vld [vmem:[%s2225 + $0x20] sm:$0xff]
                  %2236 = vst [vmem:[%s2226 + $0x40] sm:$0xff] %v2235
                $region108: #{tpu_custom_call.1} parent=102 // loop_footer
                  %s2224 = sadd.s32 1, %s2220
                $region109: #{tpu_custom_call.1} parent=102 // loop_footer_branch
                  %2219 = sbr.rel target = $region105
                $region110: #{tpu_custom_call.1} parent=102 // loop_exit
                  _
              $region103: #{tpu_custom_call.1} parent=87 // pred_fallthru
                _
              // Predicated region
              $region111: #{tpu_custom_call.1} parent=87 // pred_check
                _
              $region112: #{tpu_custom_call.1} parent=87 // pred_check_branch
                %2238 = sbr.rel target = $region114
              $region113: #{tpu_custom_call.1} parent=87 // pred_region
                _
              $region114: #{tpu_custom_call.1} parent=87 // pred_fallthru
                _
            $region88: #{tpu_custom_call.1} parent=83 // pred_fallthru
              _
            // Predicated region
            $region89: #{tpu_custom_call.1} parent=83 // pred_check
              _
            $region90: #{tpu_custom_call.1} parent=83 // pred_check_branch
              %2197 = sbr.rel target = $region92
            $region91: #{tpu_custom_call.1} parent=83 // pred_region
              loop: start=0, step=1, limit=1
              $region93: #{tpu_custom_call.1} parent=91 // loop_pre_header
                _
              $region94: #{tpu_custom_call.1} parent=91 // loop_header
                %s2200 = sphi 0, %s2204
                %p2201 = scmp.ge.s32.totalorder %s2200, 1
                %s2205 = sphi %s2172, %s2172
                %s2206 = sphi %s2191, %s2191
              $region95: #{tpu_custom_call.1} parent=91 // loop_header_branch
                %2203 = sbr.rel (%p2201) target = $region99
              $region96: #{tpu_custom_call.1} parent=91 // loop_body
                %v2207 = vld [vmem:[%s2205] sm:$0xff]
                %2208 = vst [vmem:[%s2206] sm:$0xff] %v2207
                %v2209 = vld [vmem:[%s2205 + $0x8] sm:$0xff]
                %2210 = vst [vmem:[%s2206 + $0x10] sm:$0xff] %v2209
                %v2211 = vld [vmem:[%s2205 + $0x10] sm:$0xff]
                %2212 = vst [vmem:[%s2206 + $0x20] sm:$0xff] %v2211
                %v2213 = vld [vmem:[%s2205 + $0x18] sm:$0xff]
                %2214 = vst [vmem:[%s2206 + $0x30] sm:$0xff] %v2213
                %v2215 = vld [vmem:[%s2205 + $0x20] sm:$0xff]
                %2216 = vst [vmem:[%s2206 + $0x40] sm:$0xff] %v2215
              $region97: #{tpu_custom_call.1} parent=91 // loop_footer
                %s2204 = sadd.s32 1, %s2200
              $region98: #{tpu_custom_call.1} parent=91 // loop_footer_branch
                %2199 = sbr.rel target = $region94
              $region99: #{tpu_custom_call.1} parent=91 // loop_exit
                _
            $region92: #{tpu_custom_call.1} parent=83 // pred_fallthru
              _
          $region84: #{tpu_custom_call.1} parent=79 // pred_fallthru
            _
          %2239 = vnop
        $region80: #{tpu_custom_call.1} parent=67 // pred_fallthru
          _
        // Predicated region
        $region115: #{tpu_custom_call.1} parent=67 // pred_check
          %p2240 = pneg %p359
        $region116: #{tpu_custom_call.1} parent=67 // pred_check_branch
          %2242 = sbr.rel (%p2240) target = $region118
        $region117: #{tpu_custom_call.1} parent=67 // pred_region
          %s2243 = smul.addr %s37, 6
          %s2244 = sadd.s32 %s38, %s2243
          %s2245 = smul.addr %s2244, 8
          %s2246 = scalar_lea.vmem %s13, %s2245
          // Predicated region
          $region119: #{tpu_custom_call.1} parent=117 // pred_check
            _
          $region120: #{tpu_custom_call.1} parent=117 // pred_check_branch
            %2248 = sbr.rel (0) target = $region122
          $region121: #{tpu_custom_call.1} parent=117 // pred_region
            // Predicated region
            $region123: #{tpu_custom_call.1} parent=121 // pred_check
              _
            $region124: #{tpu_custom_call.1} parent=121 // pred_check_branch
              %2250 = sbr.rel (0) target = $region126
            $region125: #{tpu_custom_call.1} parent=121 // pred_region
              // Predicated region
              $region138: #{tpu_custom_call.1} parent=125 // pred_check
                _
              $region139: #{tpu_custom_call.1} parent=125 // pred_check_branch
                %2269 = sbr.rel (0) target = $region141
              $region140: #{tpu_custom_call.1} parent=125 // pred_region
                loop: start=0, step=1, limit=1
                $region142: #{tpu_custom_call.1} parent=140 // loop_pre_header
                  _
                $region143: #{tpu_custom_call.1} parent=140 // loop_header
                  %s2271 = sphi 0, %s2275
                  %p2272 = scmp.ge.s32.totalorder %s2271, 1
                  %s2276 = sphi %s2176, %s2176
                  %s2277 = sphi %s2246, %s2246
                $region144: #{tpu_custom_call.1} parent=140 // loop_header_branch
                  %2274 = sbr.rel (%p2272) target = $region148
                $region145: #{tpu_custom_call.1} parent=140 // loop_body
                  %v2278 = vld [vmem:[%s2276] sm:$0xff]
                  %2279 = vst [vmem:[%s2277] sm:$0xff] %v2278
                  %v2280 = vld [vmem:[%s2276 + $0x8] sm:$0xff]
                  %2281 = vst [vmem:[%s2277 + $0x10] sm:$0xff] %v2280
                  %v2282 = vld [vmem:[%s2276 + $0x10] sm:$0xff]
                  %2283 = vst [vmem:[%s2277 + $0x20] sm:$0xff] %v2282
                $region146: #{tpu_custom_call.1} parent=140 // loop_footer
                  %s2275 = sadd.s32 1, %s2271
                $region147: #{tpu_custom_call.1} parent=140 // loop_footer_branch
                  %2270 = sbr.rel target = $region143
                $region148: #{tpu_custom_call.1} parent=140 // loop_exit
                  _
              $region141: #{tpu_custom_call.1} parent=125 // pred_fallthru
                _
              // Predicated region
              $region149: #{tpu_custom_call.1} parent=125 // pred_check
                _
              $region150: #{tpu_custom_call.1} parent=125 // pred_check_branch
                %2285 = sbr.rel target = $region152
              $region151: #{tpu_custom_call.1} parent=125 // pred_region
                _
              $region152: #{tpu_custom_call.1} parent=125 // pred_fallthru
                _
            $region126: #{tpu_custom_call.1} parent=121 // pred_fallthru
              _
            // Predicated region
            $region127: #{tpu_custom_call.1} parent=121 // pred_check
              _
            $region128: #{tpu_custom_call.1} parent=121 // pred_check_branch
              %2252 = sbr.rel target = $region130
            $region129: #{tpu_custom_call.1} parent=121 // pred_region
              loop: start=0, step=1, limit=1
              $region131: #{tpu_custom_call.1} parent=129 // loop_pre_header
                _
              $region132: #{tpu_custom_call.1} parent=129 // loop_header
                %s2255 = sphi 0, %s2259
                %p2256 = scmp.ge.s32.totalorder %s2255, 1
                %s2260 = sphi %s2176, %s2176
                %s2261 = sphi %s2246, %s2246
              $region133: #{tpu_custom_call.1} parent=129 // loop_header_branch
                %2258 = sbr.rel (%p2256) target = $region137
              $region134: #{tpu_custom_call.1} parent=129 // loop_body
                %v2262 = vld [vmem:[%s2260] sm:$0xff]
                %2263 = vst [vmem:[%s2261] sm:$0xff] %v2262
                %v2264 = vld [vmem:[%s2260 + $0x8] sm:$0xff]
                %2265 = vst [vmem:[%s2261 + $0x10] sm:$0xff] %v2264
                %v2266 = vld [vmem:[%s2260 + $0x10] sm:$0xff]
                %2267 = vst [vmem:[%s2261 + $0x20] sm:$0xff] %v2266
              $region135: #{tpu_custom_call.1} parent=129 // loop_footer
                %s2259 = sadd.s32 1, %s2255
              $region136: #{tpu_custom_call.1} parent=129 // loop_footer_branch
                %2254 = sbr.rel target = $region132
              $region137: #{tpu_custom_call.1} parent=129 // loop_exit
                _
            $region130: #{tpu_custom_call.1} parent=121 // pred_fallthru
              _
          $region122: #{tpu_custom_call.1} parent=117 // pred_fallthru
            _
          %2286 = vnop
        $region118: #{tpu_custom_call.1} parent=67 // pred_fallthru
          _
        // Predicated region
        $region153: #{tpu_custom_call.1} parent=67 // pred_check
          %p2287 = pneg %p387
        $region154: #{tpu_custom_call.1} parent=67 // pred_check_branch
          %2289 = sbr.rel (%p2287) target = $region156
        $region155: #{tpu_custom_call.1} parent=67 // pred_region
          %s2290 = smul.addr %s37, 10
          %s2291 = sadd.s32 %s38, %s2290
          %s2292 = smul.addr %s2291, 8
          %s2293 = scalar_lea.vmem %s14, %s2292
          // Predicated region
          $region157: #{tpu_custom_call.1} parent=155 // pred_check
            _
          $region158: #{tpu_custom_call.1} parent=155 // pred_check_branch
            %2295 = sbr.rel (0) target = $region160
          $region159: #{tpu_custom_call.1} parent=155 // pred_region
            // Predicated region
            $region161: #{tpu_custom_call.1} parent=159 // pred_check
              _
            $region162: #{tpu_custom_call.1} parent=159 // pred_check_branch
              %2297 = sbr.rel (0) target = $region164
            $region163: #{tpu_custom_call.1} parent=159 // pred_region
              // Predicated region
              $region176: #{tpu_custom_call.1} parent=163 // pred_check
                _
              $region177: #{tpu_custom_call.1} parent=163 // pred_check_branch
                %2320 = sbr.rel (0) target = $region179
              $region178: #{tpu_custom_call.1} parent=163 // pred_region
                loop: start=0, step=1, limit=1
                $region180: #{tpu_custom_call.1} parent=178 // loop_pre_header
                  _
                $region181: #{tpu_custom_call.1} parent=178 // loop_header
                  %s2322 = sphi 0, %s2326
                  %p2323 = scmp.ge.s32.totalorder %s2322, 1
                  %s2327 = sphi %s2180, %s2180
                  %s2328 = sphi %s2293, %s2293
                $region182: #{tpu_custom_call.1} parent=178 // loop_header_branch
                  %2325 = sbr.rel (%p2323) target = $region186
                $region183: #{tpu_custom_call.1} parent=178 // loop_body
                  %v2329 = vld [vmem:[%s2327] sm:$0xff]
                  %2330 = vst [vmem:[%s2328] sm:$0xff] %v2329
                  %v2331 = vld [vmem:[%s2327 + $0x8] sm:$0xff]
                  %2332 = vst [vmem:[%s2328 + $0x10] sm:$0xff] %v2331
                  %v2333 = vld [vmem:[%s2327 + $0x10] sm:$0xff]
                  %2334 = vst [vmem:[%s2328 + $0x20] sm:$0xff] %v2333
                  %v2335 = vld [vmem:[%s2327 + $0x18] sm:$0xff]
                  %2336 = vst [vmem:[%s2328 + $0x30] sm:$0xff] %v2335
                  %v2337 = vld [vmem:[%s2327 + $0x20] sm:$0xff]
                  %2338 = vst [vmem:[%s2328 + $0x40] sm:$0xff] %v2337
                $region184: #{tpu_custom_call.1} parent=178 // loop_footer
                  %s2326 = sadd.s32 1, %s2322
                $region185: #{tpu_custom_call.1} parent=178 // loop_footer_branch
                  %2321 = sbr.rel target = $region181
                $region186: #{tpu_custom_call.1} parent=178 // loop_exit
                  _
              $region179: #{tpu_custom_call.1} parent=163 // pred_fallthru
                _
              // Predicated region
              $region187: #{tpu_custom_call.1} parent=163 // pred_check
                _
              $region188: #{tpu_custom_call.1} parent=163 // pred_check_branch
                %2340 = sbr.rel target = $region190
              $region189: #{tpu_custom_call.1} parent=163 // pred_region
                _
              $region190: #{tpu_custom_call.1} parent=163 // pred_fallthru
                _
            $region164: #{tpu_custom_call.1} parent=159 // pred_fallthru
              _
            // Predicated region
            $region165: #{tpu_custom_call.1} parent=159 // pred_check
              _
            $region166: #{tpu_custom_call.1} parent=159 // pred_check_branch
              %2299 = sbr.rel target = $region168
            $region167: #{tpu_custom_call.1} parent=159 // pred_region
              loop: start=0, step=1, limit=1
              $region169: #{tpu_custom_call.1} parent=167 // loop_pre_header
                _
              $region170: #{tpu_custom_call.1} parent=167 // loop_header
                %s2302 = sphi 0, %s2306
                %p2303 = scmp.ge.s32.totalorder %s2302, 1
                %s2307 = sphi %s2180, %s2180
                %s2308 = sphi %s2293, %s2293
              $region171: #{tpu_custom_call.1} parent=167 // loop_header_branch
                %2305 = sbr.rel (%p2303) target = $region175
              $region172: #{tpu_custom_call.1} parent=167 // loop_body
                %v2309 = vld [vmem:[%s2307] sm:$0xff]
                %2310 = vst [vmem:[%s2308] sm:$0xff] %v2309
                %v2311 = vld [vmem:[%s2307 + $0x8] sm:$0xff]
                %2312 = vst [vmem:[%s2308 + $0x10] sm:$0xff] %v2311
                %v2313 = vld [vmem:[%s2307 + $0x10] sm:$0xff]
                %2314 = vst [vmem:[%s2308 + $0x20] sm:$0xff] %v2313
                %v2315 = vld [vmem:[%s2307 + $0x18] sm:$0xff]
                %2316 = vst [vmem:[%s2308 + $0x30] sm:$0xff] %v2315
                %v2317 = vld [vmem:[%s2307 + $0x20] sm:$0xff]
                %2318 = vst [vmem:[%s2308 + $0x40] sm:$0xff] %v2317
              $region173: #{tpu_custom_call.1} parent=167 // loop_footer
                %s2306 = sadd.s32 1, %s2302
              $region174: #{tpu_custom_call.1} parent=167 // loop_footer_branch
                %2301 = sbr.rel target = $region170
              $region175: #{tpu_custom_call.1} parent=167 // loop_exit
                _
            $region168: #{tpu_custom_call.1} parent=159 // pred_fallthru
              _
          $region160: #{tpu_custom_call.1} parent=155 // pred_fallthru
            _
          %2341 = vnop
        $region156: #{tpu_custom_call.1} parent=67 // pred_fallthru
          _
        // Predicated region
        $region191: #{tpu_custom_call.1} parent=67 // pred_check
          %p2342 = pneg %p415
        $region192: #{tpu_custom_call.1} parent=67 // pred_check_branch
          %2344 = sbr.rel (%p2342) target = $region194
        $region193: #{tpu_custom_call.1} parent=67 // pred_region
          %s2345 = smul.addr %s37, 10
          %s2346 = sadd.s32 %s38, %s2345
          %s2347 = smul.addr %s2346, 8
          %s2348 = scalar_lea.vmem %s15, %s2347
          // Predicated region
          $region195: #{tpu_custom_call.1} parent=193 // pred_check
            _
          $region196: #{tpu_custom_call.1} parent=193 // pred_check_branch
            %2350 = sbr.rel (0) target = $region198
          $region197: #{tpu_custom_call.1} parent=193 // pred_region
            // Predicated region
            $region199: #{tpu_custom_call.1} parent=197 // pred_check
              _
            $region200: #{tpu_custom_call.1} parent=197 // pred_check_branch
              %2352 = sbr.rel (0) target = $region202
            $region201: #{tpu_custom_call.1} parent=197 // pred_region
              // Predicated region
              $region214: #{tpu_custom_call.1} parent=201 // pred_check
                _
              $region215: #{tpu_custom_call.1} parent=201 // pred_check_branch
                %2375 = sbr.rel (0) target = $region217
              $region216: #{tpu_custom_call.1} parent=201 // pred_region
                loop: start=0, step=1, limit=1
                $region218: #{tpu_custom_call.1} parent=216 // loop_pre_header
                  _
                $region219: #{tpu_custom_call.1} parent=216 // loop_header
                  %s2377 = sphi 0, %s2381
                  %p2378 = scmp.ge.s32.totalorder %s2377, 1
                  %s2382 = sphi %s2184, %s2184
                  %s2383 = sphi %s2348, %s2348
                $region220: #{tpu_custom_call.1} parent=216 // loop_header_branch
                  %2380 = sbr.rel (%p2378) target = $region224
                $region221: #{tpu_custom_call.1} parent=216 // loop_body
                  %v2384 = vld [vmem:[%s2382] sm:$0xff]
                  %2385 = vst [vmem:[%s2383] sm:$0xff] %v2384
                  %v2386 = vld [vmem:[%s2382 + $0x8] sm:$0xff]
                  %2387 = vst [vmem:[%s2383 + $0x10] sm:$0xff] %v2386
                  %v2388 = vld [vmem:[%s2382 + $0x10] sm:$0xff]
                  %2389 = vst [vmem:[%s2383 + $0x20] sm:$0xff] %v2388
                  %v2390 = vld [vmem:[%s2382 + $0x18] sm:$0xff]
                  %2391 = vst [vmem:[%s2383 + $0x30] sm:$0xff] %v2390
                  %v2392 = vld [vmem:[%s2382 + $0x20] sm:$0xff]
                  %2393 = vst [vmem:[%s2383 + $0x40] sm:$0xff] %v2392
                $region222: #{tpu_custom_call.1} parent=216 // loop_footer
                  %s2381 = sadd.s32 1, %s2377
                $region223: #{tpu_custom_call.1} parent=216 // loop_footer_branch
                  %2376 = sbr.rel target = $region219
                $region224: #{tpu_custom_call.1} parent=216 // loop_exit
                  _
              $region217: #{tpu_custom_call.1} parent=201 // pred_fallthru
                _
              // Predicated region
              $region225: #{tpu_custom_call.1} parent=201 // pred_check
                _
              $region226: #{tpu_custom_call.1} parent=201 // pred_check_branch
                %2395 = sbr.rel target = $region228
              $region227: #{tpu_custom_call.1} parent=201 // pred_region
                _
              $region228: #{tpu_custom_call.1} parent=201 // pred_fallthru
                _
            $region202: #{tpu_custom_call.1} parent=197 // pred_fallthru
              _
            // Predicated region
            $region203: #{tpu_custom_call.1} parent=197 // pred_check
              _
            $region204: #{tpu_custom_call.1} parent=197 // pred_check_branch
              %2354 = sbr.rel target = $region206
            $region205: #{tpu_custom_call.1} parent=197 // pred_region
              loop: start=0, step=1, limit=1
              $region207: #{tpu_custom_call.1} parent=205 // loop_pre_header
                _
              $region208: #{tpu_custom_call.1} parent=205 // loop_header
                %s2357 = sphi 0, %s2361
                %p2358 = scmp.ge.s32.totalorder %s2357, 1
                %s2362 = sphi %s2184, %s2184
                %s2363 = sphi %s2348, %s2348
              $region209: #{tpu_custom_call.1} parent=205 // loop_header_branch
                %2360 = sbr.rel (%p2358) target = $region213
              $region210: #{tpu_custom_call.1} parent=205 // loop_body
                %v2364 = vld [vmem:[%s2362] sm:$0xff]
                %2365 = vst [vmem:[%s2363] sm:$0xff] %v2364
                %v2366 = vld [vmem:[%s2362 + $0x8] sm:$0xff]
                %2367 = vst [vmem:[%s2363 + $0x10] sm:$0xff] %v2366
                %v2368 = vld [vmem:[%s2362 + $0x10] sm:$0xff]
                %2369 = vst [vmem:[%s2363 + $0x20] sm:$0xff] %v2368
                %v2370 = vld [vmem:[%s2362 + $0x18] sm:$0xff]
                %2371 = vst [vmem:[%s2363 + $0x30] sm:$0xff] %v2370
                %v2372 = vld [vmem:[%s2362 + $0x20] sm:$0xff]
                %2373 = vst [vmem:[%s2363 + $0x40] sm:$0xff] %v2372
              $region211: #{tpu_custom_call.1} parent=205 // loop_footer
                %s2361 = sadd.s32 1, %s2357
              $region212: #{tpu_custom_call.1} parent=205 // loop_footer_branch
                %2356 = sbr.rel target = $region208
              $region213: #{tpu_custom_call.1} parent=205 // loop_exit
                _
            $region206: #{tpu_custom_call.1} parent=197 // pred_fallthru
              _
          $region198: #{tpu_custom_call.1} parent=193 // pred_fallthru
            _
          %2396 = vnop
        $region194: #{tpu_custom_call.1} parent=67 // pred_fallthru
          _
      $region68: #{tpu_custom_call.1} parent=5 // pred_fallthru
        _
      %p2397 = scmp.le.s32.totalorder 2, %s28
      // Predicated region
      $region229: #{tpu_custom_call.1} parent=5 // pred_check
        %p2398 = pneg %p2397
      $region230: #{tpu_custom_call.1} parent=5 // pred_check_branch
        %2400 = sbr.rel (%p2398) target = $region232
      $region231: #{tpu_custom_call.1} parent=5 // pred_region
        %s2401 = ssub.s32 %s28, 2
        // Predicated region
        $region233: #{tpu_custom_call.1} parent=231 // pred_check
          %p2402 = pneg %p337
        $region234: #{tpu_custom_call.1} parent=231 // pred_check_branch
          %2404 = sbr.rel (%p2402) target = $region236
        $region235: #{tpu_custom_call.1} parent=231 // pred_region
          %s2405 = sand.u32 %s322, 1
          %s2406 = sand.u32 %s322, 1
          %s2407 = smul.addr %s2406, 40
          %s2408 = scalar_lea.vmem [#allocation6], %s2407
        $region236: #{tpu_custom_call.1} parent=231 // pred_fallthru
          _
        // Predicated region
        $region237: #{tpu_custom_call.1} parent=231 // pred_check
          %p2409 = pneg %p365
        $region238: #{tpu_custom_call.1} parent=231 // pred_check_branch
          %2411 = sbr.rel (%p2409) target = $region240
        $region239: #{tpu_custom_call.1} parent=231 // pred_region
          %s2412 = sand.u32 %s350, 1
          %s2413 = sand.u32 %s350, 1
          %s2414 = smul.addr %s2413, 24
          %s2415 = scalar_lea.vmem [#allocation7], %s2414
        $region240: #{tpu_custom_call.1} parent=231 // pred_fallthru
          _
        // Predicated region
        $region241: #{tpu_custom_call.1} parent=231 // pred_check
          %p2416 = pneg %p393
        $region242: #{tpu_custom_call.1} parent=231 // pred_check_branch
          %2418 = sbr.rel (%p2416) target = $region244
        $region243: #{tpu_custom_call.1} parent=231 // pred_region
          %s2419 = sand.u32 %s378, 1
          %s2420 = sand.u32 %s378, 1
          %s2421 = smul.addr %s2420, 40
          %s2422 = scalar_lea.vmem [#allocation8], %s2421
        $region244: #{tpu_custom_call.1} parent=231 // pred_fallthru
          _
        // Predicated region
        $region245: #{tpu_custom_call.1} parent=231 // pred_check
          %p2423 = pneg %p421
        $region246: #{tpu_custom_call.1} parent=231 // pred_check_branch
          %2425 = sbr.rel (%p2423) target = $region248
        $region247: #{tpu_custom_call.1} parent=231 // pred_region
          %s2426 = sand.u32 %s406, 1
          %s2427 = sand.u32 %s406, 1
          %s2428 = smul.addr %s2427, 40
          %s2429 = scalar_lea.vmem [#allocation9], %s2428
        $region248: #{tpu_custom_call.1} parent=231 // pred_fallthru
          _
      $region232: #{tpu_custom_call.1} parent=5 // pred_fallthru
        _
    $region6: #{tpu_custom_call.1} parent=1 // loop_footer
      %s32 = sadd.s32 1, %s28
    $region7: #{tpu_custom_call.1} parent=1 // loop_footer_branch
      %27 = sbr.rel target = $region3
    $region8: #{tpu_custom_call.1} parent=1 // loop_exit
      _
    %2430 = vsyncpa [#allocation3], 1
    %s2431 = scalar_lea.sflag [#allocation3], 1
    %2432 = vsyncpa %s2431, 1
    %2433 = vsyncpa [#allocation5], 1
    %s2434 = scalar_lea.sflag [#allocation5], 1
    %2435 = vsyncpa %s2434, 1

</llo_original>
